<compile_context>
chip_gen: v7x
topology: tpu7x:2x2x1
jax: 0.10.0
libtpu: 0.0.40
codegen_flags: <defaults>
</compile_context>

<pallas_src>
import functools
import numpy as np
import jax
import jax.numpy as jnp
from jax import lax
from jax.experimental import pallas as pl
from jax.experimental.pallas import tpu as pltpu

# ----- scaled-down dimensions (original: fea_dim=768/512, reduce_dim=1024) -----
N_CLASSES = 19          # len(train_label_list) == len(prototype_num_eachclass)
FEA_DIM = 64            # backbone output channels (PPM in_dim)
REDUCE_DIM = 128        # down / projector channels
PPM_BINS = (1, 2, 3, 6)
EPS = 1e-5              # BatchNorm eps

# TODO(synk): at the real model dims (reduce_dim=1024, ~60x60 features) the
# fused projector chain must be re-tiled (grid over the output-channel axis per
# conv stage, bf16 MXU operands with f32 epilogue, raised vmem_limit_bytes via
# pltpu.CompilerParams); at the toy sizes used here launch overhead dominates,
# so full fusion in a single VMEM block is the right regime.


def _vmem_spec():
    return pl.BlockSpec(memory_space=pltpu.MemorySpace.VMEM)


# ---------------------------- Pallas kernels ----------------------------------

def _batchnorm_train(y, gamma, beta, count, relu):
    """Train-mode BatchNorm over `count` rows: one-pass stats (sum / sum-sq),
    biased variance, f32 epilogue, optional ReLU. Zero-padded rows contribute
    nothing to the sums, so stats stay exact when `count` < y.shape[0]."""
    inv = 1.0 / count
    mean = jnp.sum(y, axis=0, keepdims=True) * inv
    sq = jnp.sum(y * y, axis=0, keepdims=True) * inv
    var = jnp.maximum(sq - mean * mean, 0.0)
    y = (y - mean) * lax.rsqrt(var + EPS)
    y = y * gamma + beta
    if relu:
        y = jnp.maximum(y, 0.0)
    return y


def _ppm_kernel(x_ref, w_ref, g_ref, b_ref, o_ref, *, seg_pad, seg_rows):
    """All PPM bins in one launch.  x_ref rows are the concatenated
    adaptive-pooled pixels of the 4 bins, each segment zero-padded to an 8-row
    boundary so every slice is sublane aligned.  Per-bin weights are stacked
    along the leading axis of w_ref/g_ref/b_ref."""
    start = 0
    for i in range(len(seg_rows)):
        p = seg_pad[i]
        xs = x_ref[start:start + p, :]                                # (p, C)
        y = jnp.dot(xs, w_ref[i], preferred_element_type=jnp.float32)  # (p, red)
        y = _batchnorm_train(y, g_ref[i], b_ref[i], float(seg_rows[i]), relu=True)
        o_ref[start:start + p, :] = y
        start += p


def _projector_gap_kernel(x_ref, wd_ref, gd_ref, bd_ref,
                          w0_ref, g0_ref, b0_ref,
                          w1_ref, g1_ref, b1_ref,
                          m_ref, o_ref):
    """Fused: 1x1 conv + BN + ReLU (self.down) -> 1x1 conv + BN + ReLU
    (projector[0..2]) -> 1x1 conv + BN (projector[3..4]) -> Weighted_GAP for
    all classes.  Only the (n_classes, reduce_dim) prototypes are stored."""
    x = x_ref[...]                                                     # (M, 2*FEA_DIM)
    m_rows = float(x.shape[0])
    y = jnp.dot(x, wd_ref[...], preferred_element_type=jnp.float32)
    y = _batchnorm_train(y, gd_ref[...], bd_ref[...], m_rows, relu=True)
    y = jnp.dot(y, w0_ref[...], preferred_element_type=jnp.float32)
    y = _batchnorm_train(y, g0_ref[...], b0_ref[...], m_rows, relu=True)
    y = jnp.dot(y, w1_ref[...], preferred_element_type=jnp.float32)
    y = _batchnorm_train(y, g1_ref[...], b1_ref[...], m_rows, relu=False)
    # Weighted_GAP: proto[k,c] = sum_hw mask[k,hw]*feat[hw,c] / (sum_hw mask[k,hw] + 0.0005)
    m = m_ref[...]                                                     # (nC, M)
    num = jnp.dot(m, y, preferred_element_type=jnp.float32)            # (nC, reduce_dim)
    area = jnp.sum(m, axis=1, keepdims=True) + 0.0005
    o_ref[...] = num / area


# ---------------------------- Pallas wrappers ----------------------------------

def ppm_conv_bn_all_bins(x_pad, w_stack, g_stack, b_stack, seg_pad, seg_rows):
    Mtot = x_pad.shape[0]
    red = w_stack.shape[-1]
    kernel = functools.partial(_ppm_kernel, seg_pad=seg_pad, seg_rows=seg_rows)
    return pl.pallas_call(
        kernel,
        out_shape=jax.ShapeDtypeStruct((Mtot, red), jnp.float32),
        in_specs=[_vmem_spec()] * 4,
        out_specs=_vmem_spec(),
    )(x_pad, w_stack, g_stack, b_stack)


def projector_and_gap(feat2d, down_p, proj0_p, proj1_p, masks_2d):
    nC = masks_2d.shape[0]
    N = down_p[0].shape[1]

    def flat(p):
        w, g, b = p
        return (w, g.reshape(1, -1), b.reshape(1, -1))

    args = (feat2d,) + flat(down_p) + flat(proj0_p) + flat(proj1_p) + (masks_2d,)
    return pl.pallas_call(
        _projector_gap_kernel,
        out_shape=jax.ShapeDtypeStruct((nC, N), jnp.float32),
        in_specs=[_vmem_spec()] * len(args),
        out_specs=_vmem_spec(),
    )(*args)


# ------------------------------- JAX glue --------------------------------------

def conv3x3(x, w):
    # x: (B,H,W,Cin), w: (3,3,Cin,Cout), padding=1 (matches nn.Conv2d(k=3,p=1))
    return lax.conv_general_dilated(
        x, w, window_strides=(1, 1), padding=((1, 1), (1, 1)),
        dimension_numbers=("NHWC", "HWIO", "NHWC"))


def maxpool2(x):
    return lax.reduce_window(x, -jnp.inf, lax.max,
                             (1, 2, 2, 1), (1, 2, 2, 1), "VALID")


def adaptive_pool_matrix(in_size, out_size):
    # rows of P implement torch adaptive_avg_pool windows [floor(i*I/O), ceil((i+1)*I/O))
    P = np.zeros((out_size, in_size), np.float32)
    for i in range(out_size):
        s = (i * in_size) // out_size
        e = -(-((i + 1) * in_size) // out_size)
        P[i, s:e] = 1.0 / (e - s)
    return P


def bilinear_matrix(in_size, out_size):
    # F.interpolate(mode='bilinear', align_corners=True), separable 1-D weights
    U = np.zeros((out_size, in_size), np.float32)
    if in_size == 1:
        U[:, 0] = 1.0
        return U
    if out_size == 1:
        U[0, 0] = 1.0
        return U
    scale = (in_size - 1) / (out_size - 1)
    for i in range(out_size):
        src = i * scale
        i0 = int(np.floor(src))
        i1 = min(i0 + 1, in_size - 1)
        f = src - i0
        U[i, i0] += 1.0 - f
        U[i, i1] += f
    return U


def backbone(x, p):
    # TODO(synk): frozen pretrained VGG16 feature extractor is structurally reduced
    # to one 3x3 conv per stage (scaled channels) in plain JAX; pooling pattern
    # (x16 downsample, no ReLU after the last conv) matches get_vgg16_layer(bn=False).
    h = maxpool2(jax.nn.relu(conv3x3(x, p['l0'])))            # layer0
    h = maxpool2(jax.nn.relu(conv3x3(h, p['l1'])))            # layer1
    h = maxpool2(jax.nn.relu(conv3x3(h, p['l2'])))            # layer2
    h = jax.nn.relu(conv3x3(h, p['l3']))                      # layer3 (no pool)
    h = conv3x3(maxpool2(h), p['l4'])                         # layer4 (pool first, no final relu)
    return h


def ppm_apply(x, ppm_w, ppm_g, ppm_b):
    B, H, W, C = x.shape
    seg_rows = tuple(B * b * b for b in PPM_BINS)             # real rows per bin
    seg_pad = tuple(-(-r // 8) * 8 for r in seg_rows)         # 8-aligned segment sizes
    Mtot = sum(seg_pad)

    # adaptive average pooling per bin (tiny, static matrices)
    pooled = []
    for bin_ in PPM_BINS:
        Ph = jnp.asarray(adaptive_pool_matrix(H, bin_))
        Pw = jnp.asarray(adaptive_pool_matrix(W, bin_))
        pp = jnp.einsum('ph,bhwc->bpwc', Ph, x)
        pp = jnp.einsum('qw,bpwc->bpqc', Pw, pp)              # (B, bin, bin, C)
        pooled.append(pp.reshape(B * bin_ * bin_, C))

    # pack all bins into one zero-padded block -> single Pallas launch
    x_pad = jnp.zeros((Mtot, C), jnp.float32)
    start = 0
    for pp, pad in zip(pooled, seg_pad):
        x_pad = x_pad.at[start:start + pp.shape[0]].set(pp)
        start += pad

    y_pad = ppm_conv_bn_all_bins(x_pad, ppm_w, ppm_g, ppm_b, seg_pad, seg_rows)

    outs = [x]
    start = 0
    for bin_, n, pad in zip(PPM_BINS, seg_rows, seg_pad):
        y = y_pad[start:start + n].reshape(B, bin_, bin_, -1)
        Uh = jnp.asarray(bilinear_matrix(bin_, H))
        Uw = jnp.asarray(bilinear_matrix(bin_, W))
        up = jnp.einsum('hp,bpqc->bhqc', Uh, y)
        up = jnp.einsum('wq,bhqc->bhwc', Uw, up)
        outs.append(up)
        start += pad
    return jnp.concatenate(outs, axis=-1)                     # (B, H, W, 2*FEA_DIM)


@jax.jit
def _device_forward(params, s_x, s_y, labels):
    # s_x: (B,3,Him,Wim) NCHW; s_y: (B,Him,Wim) int labels.  B == 1 (as in the
    # reference usage: one support image per call).
    x = jnp.transpose(s_x, (0, 2, 3, 1))                      # -> NHWC
    supp_feat_4 = backbone(x, params['backbone'])             # (B, H, W, FEA_DIM)
    # NOTE: the original vgg branch declares fea_dim=768 but feeds the 512-ch layer4
    # output into PPM (shape bug); here fea_dim == backbone output channels so it runs.
    feat = ppm_apply(supp_feat_4, params['ppm_w'], params['ppm_g'], params['ppm_b'])
    B, H, W, C2 = feat.shape
    feat2d = feat.reshape(B * H * W, C2)

    # per-class masks, bilinear(align_corners) resized to feature resolution
    masks_full = (s_y[0][None, :, :] == labels[:, None, None]).astype(jnp.float32)
    Uh = jnp.asarray(bilinear_matrix(s_y.shape[1], H))
    Uw = jnp.asarray(bilinear_matrix(s_y.shape[2], W))
    masks_small = jnp.einsum('hH,kHW,wW->khw', Uh, masks_full, Uw)   # (nC, H, W)

    nC = labels.shape[0]
    protos = projector_and_gap(feat2d, params['down'], params['proj0'],
                               params['proj1'], masks_small.reshape(nC, H * W))

    # Device-side replacement for np.where(mask == 1): only (nC,) bools go D2H.
    # TODO(synk): mirrors the reference's exact-equality criterion
    # (len(np.where(mask==1)[0] > 500) truthiness); tiny tolerance guards round-off.
    has_valid = jnp.any(masks_small >= 1.0 - 1e-6, axis=(1, 2))
    return protos, has_valid


def few_domain_compro_forward(params, s_x, s_y, shot, prototype_num_eachclass,
                              train_label_list, image_name, valid_image_list):
    labels = jnp.asarray(train_label_list, jnp.int32)
    protos, has_valid = _device_forward(params, s_x, s_y, labels)

    # host-side bookkeeping (mirrors the list / counter logic of the reference forward)
    has_valid_np = np.asarray(jax.device_get(has_valid))
    n_classes = len(train_label_list)
    keep = np.zeros(n_classes, np.float32)
    for k in range(n_classes):
        if bool(has_valid_np[k]) and prototype_num_eachclass[k] < shot:
            if image_name[0] not in valid_image_list:
                valid_image_list.append(image_name[0])
            prototype_num_eachclass[k] = prototype_num_eachclass[k] + 1
            keep[k] = 1.0
        # else: prototype zeroed (torch.zeros_like(prototype))
    prototype_tensor = protos * jnp.asarray(keep)[:, None]
    return prototype_num_eachclass, prototype_tensor, valid_image_list


# ----------------------------- parameter init ----------------------------------

def init_params(key):
    ks = iter(jax.random.split(key, 32))

    def conv_w(shape):
        return 0.1 * jax.random.normal(next(ks), shape, jnp.float32)

    def bn(n):
        g = 1.0 + 0.1 * jax.random.normal(next(ks), (n,), jnp.float32)
        b = 0.1 * jax.random.normal(next(ks), (n,), jnp.float32)
        return g, b

    c0, c1, c2 = 8, 16, 32
    backbone_p = {
        'l0': conv_w((3, 3, 3, c0)),
        'l1': conv_w((3, 3, c0, c1)),
        'l2': conv_w((3, 3, c1, c2)),
        'l3': conv_w((3, 3, c2, FEA_DIM)),
        'l4': conv_w((3, 3, FEA_DIM, FEA_DIM)),
    }
    red = FEA_DIM // 4
    ppm_ws, ppm_gs, ppm_bs = [], [], []
    for _ in PPM_BINS:
        g, b = bn(red)
        ppm_ws.append(conv_w((FEA_DIM, red)))
        ppm_gs.append(g.reshape(1, red))
        ppm_bs.append(b.reshape(1, red))
    down_p = (conv_w((FEA_DIM * 2, REDUCE_DIM)),) + bn(REDUCE_DIM)
    proj0_p = (conv_w((REDUCE_DIM, REDUCE_DIM)),) + bn(REDUCE_DIM)
    proj1_p = (conv_w((REDUCE_DIM, REDUCE_DIM)),) + bn(REDUCE_DIM)
    return {'backbone': backbone_p,
            'ppm_w': jnp.stack(ppm_ws),                      # (4, FEA_DIM, red)
            'ppm_g': jnp.stack(ppm_gs),                      # (4, 1, red)
            'ppm_b': jnp.stack(ppm_bs),                      # (4, 1, red)
            'down': down_p, 'proj0': proj0_p, 'proj1': proj1_p}


if __name__ == "__main__":
    key = jax.random.PRNGKey(0)
    kx, ky, kp = jax.random.split(key, 3)
    s_x = jax.random.normal(kx, (1, 3, 64, 64), jnp.float32)                    # support image (NCHW)
    s_y = jax.random.randint(ky, (1, 64, 64), 0, N_CLASSES).astype(jnp.int32)   # support label map
    params = init_params(kp)

    prototype_num_eachclass = np.zeros(N_CLASSES, dtype=np.float32)
    train_label_list = list(range(N_CLASSES))

    counts, prototype_tensor, valid_image_list = few_domain_compro_forward(
        params, s_x, s_y, shot=5,
        prototype_num_eachclass=prototype_num_eachclass,
        train_label_list=train_label_list,
        image_name=["img_0"],
        valid_image_list=[])

    jax.block_until_ready(prototype_tensor)
    assert prototype_tensor.shape == (N_CLASSES, REDUCE_DIM)
    assert counts.shape == (N_CLASSES,)
    print("KERNEL_OK")
</pallas_src>

<mosaic_0001>
module attributes {stable_mosaic.version = 11 : i64} {
  func.func @_ppm_kernel(%arg0: memref<72x64xf32, #tpu.memory_space<vmem>>, %arg1: memref<4x64x16xf32, #tpu.memory_space<vmem>>, %arg2: memref<4x1x16xf32, #tpu.memory_space<vmem>>, %arg3: memref<4x1x16xf32, #tpu.memory_space<vmem>>, %arg4: memref<72x16xf32, #tpu.memory_space<vmem>>) attributes {dimension_semantics = [], scalar_prefetch = 0 : i64, scratch_operands = 0 : i64, tpu.core_type = #tpu.core_type<tc>} {
    %c0 = arith.constant 0 : index
    %c0_0 = arith.constant 0 : index
    %0 = vector.load %arg0[%c0, %c0_0] : memref<72x64xf32, #tpu.memory_space<vmem>>, vector<8x64xf32>
    %c0_1 = arith.constant 0 : index
    %c0_2 = arith.constant 0 : index
    %c0_3 = arith.constant 0 : index
    %1 = vector.load %arg1[%c0_1, %c0_2, %c0_3] : memref<4x64x16xf32, #tpu.memory_space<vmem>>, vector<1x64x16xf32>
    %2 = vector.shape_cast %1 : vector<1x64x16xf32> to vector<64x16xf32>
    %cst = arith.constant dense<0.000000e+00> : vector<8x16xf32>
    %3 = tpu.matmul %0, %2, %cst {dimension_numbers = #tpu.dot_dimension_numbers<[1], [0], [0], [1], [0, 0, 1, 1], [], []>} : vector<8x64xf32>, vector<64x16xf32>, vector<8x16xf32> -> vector<8x16xf32>
    %c0_4 = arith.constant 0 : index
    %c0_5 = arith.constant 0 : index
    %c0_6 = arith.constant 0 : index
    %4 = vector.load %arg2[%c0_4, %c0_5, %c0_6] : memref<4x1x16xf32, #tpu.memory_space<vmem>>, vector<1x1x16xf32>
    %5 = vector.shape_cast %4 : vector<1x1x16xf32> to vector<1x16xf32>
    %c0_7 = arith.constant 0 : index
    %c0_8 = arith.constant 0 : index
    %c0_9 = arith.constant 0 : index
    %6 = vector.load %arg3[%c0_7, %c0_8, %c0_9] : memref<4x1x16xf32, #tpu.memory_space<vmem>>, vector<1x1x16xf32>
    %7 = vector.shape_cast %6 : vector<1x1x16xf32> to vector<1x16xf32>
    %cst_10 = arith.constant dense<0.000000e+00> : vector<16xf32>
    %8 = vector.multi_reduction <add>, %3, %cst_10 [0] : vector<8x16xf32> to vector<16xf32>
    %9 = vector.shape_cast %8 : vector<16xf32> to vector<1x16xf32>
    %cst_11 = arith.constant 1.000000e+00 : f32
    %10 = vector.broadcast %cst_11 : f32 to vector<1x16xf32>
    %11 = arith.mulf %9, %10 : vector<1x16xf32>
    %12 = arith.mulf %3, %3 : vector<8x16xf32>
    %cst_12 = arith.constant dense<0.000000e+00> : vector<16xf32>
    %13 = vector.multi_reduction <add>, %12, %cst_12 [0] : vector<8x16xf32> to vector<16xf32>
    %14 = vector.shape_cast %13 : vector<16xf32> to vector<1x16xf32>
    %cst_13 = arith.constant 1.000000e+00 : f32
    %15 = vector.broadcast %cst_13 : f32 to vector<1x16xf32>
    %16 = arith.mulf %14, %15 : vector<1x16xf32>
    %17 = arith.mulf %11, %11 : vector<1x16xf32>
    %18 = arith.subf %16, %17 : vector<1x16xf32>
    %cst_14 = arith.constant 0.000000e+00 : f32
    %19 = vector.broadcast %cst_14 : f32 to vector<1x16xf32>
    %20 = arith.maximumf %18, %19 : vector<1x16xf32>
    %21 = vector.broadcast %11 : vector<1x16xf32> to vector<8x16xf32>
    %22 = arith.subf %3, %21 : vector<8x16xf32>
    %cst_15 = arith.constant 9.99999974E-6 : f32
    %23 = vector.broadcast %cst_15 : f32 to vector<1x16xf32>
    %24 = arith.addf %20, %23 : vector<1x16xf32>
    %25 = math.rsqrt %24 : vector<1x16xf32>
    %26 = vector.broadcast %25 : vector<1x16xf32> to vector<8x16xf32>
    %27 = arith.mulf %22, %26 : vector<8x16xf32>
    %28 = vector.broadcast %5 : vector<1x16xf32> to vector<8x16xf32>
    %29 = arith.mulf %27, %28 : vector<8x16xf32>
    %30 = vector.broadcast %7 : vector<1x16xf32> to vector<8x16xf32>
    %31 = arith.addf %29, %30 : vector<8x16xf32>
    %cst_16 = arith.constant 0.000000e+00 : f32
    %32 = vector.broadcast %cst_16 : f32 to vector<8x16xf32>
    %33 = arith.maximumf %31, %32 : vector<8x16xf32>
    %c0_17 = arith.constant 0 : index
    %c0_18 = arith.constant 0 : index
    %34 = vector.load %arg4[%c0_17, %c0_18] : memref<72x16xf32, #tpu.memory_space<vmem>>, vector<8x16xf32>
    tpu.vector_store %arg4[%c0_17, %c0_18], %33 {strides = array<i32>} : memref<72x16xf32, #tpu.memory_space<vmem>>, vector<8x16xf32>,
    %c8 = arith.constant 8 : index
    %c0_19 = arith.constant 0 : index
    %35 = vector.load %arg0[%c8, %c0_19] : memref<72x64xf32, #tpu.memory_space<vmem>>, vector<8x64xf32>
    %c1 = arith.constant 1 : index
    %c0_20 = arith.constant 0 : index
    %c0_21 = arith.constant 0 : index
    %36 = vector.load %arg1[%c1, %c0_20, %c0_21] : memref<4x64x16xf32, #tpu.memory_space<vmem>>, vector<1x64x16xf32>
    %37 = vector.shape_cast %36 : vector<1x64x16xf32> to vector<64x16xf32>
    %cst_22 = arith.constant dense<0.000000e+00> : vector<8x16xf32>
    %38 = tpu.matmul %35, %37, %cst_22 {dimension_numbers = #tpu.dot_dimension_numbers<[1], [0], [0], [1], [0, 0, 1, 1], [], []>} : vector<8x64xf32>, vector<64x16xf32>, vector<8x16xf32> -> vector<8x16xf32>
    %c1_23 = arith.constant 1 : index
    %c0_24 = arith.constant 0 : index
    %c0_25 = arith.constant 0 : index
    %39 = vector.load %arg2[%c1_23, %c0_24, %c0_25] : memref<4x1x16xf32, #tpu.memory_space<vmem>>, vector<1x1x16xf32>
    %40 = vector.shape_cast %39 : vector<1x1x16xf32> to vector<1x16xf32>
    %c1_26 = arith.constant 1 : index
    %c0_27 = arith.constant 0 : index
    %c0_28 = arith.constant 0 : index
    %41 = vector.load %arg3[%c1_26, %c0_27, %c0_28] : memref<4x1x16xf32, #tpu.memory_space<vmem>>, vector<1x1x16xf32>
    %42 = vector.shape_cast %41 : vector<1x1x16xf32> to vector<1x16xf32>
    %cst_29 = arith.constant dense<0.000000e+00> : vector<16xf32>
    %43 = vector.multi_reduction <add>, %38, %cst_29 [0] : vector<8x16xf32> to vector<16xf32>
    %44 = vector.shape_cast %43 : vector<16xf32> to vector<1x16xf32>
    %cst_30 = arith.constant 2.500000e-01 : f32
    %45 = vector.broadcast %cst_30 : f32 to vector<1x16xf32>
    %46 = arith.mulf %44, %45 : vector<1x16xf32>
    %47 = arith.mulf %38, %38 : vector<8x16xf32>
    %cst_31 = arith.constant dense<0.000000e+00> : vector<16xf32>
    %48 = vector.multi_reduction <add>, %47, %cst_31 [0] : vector<8x16xf32> to vector<16xf32>
    %49 = vector.shape_cast %48 : vector<16xf32> to vector<1x16xf32>
    %cst_32 = arith.constant 2.500000e-01 : f32
    %50 = vector.broadcast %cst_32 : f32 to vector<1x16xf32>
    %51 = arith.mulf %49, %50 : vector<1x16xf32>
    %52 = arith.mulf %46, %46 : vector<1x16xf32>
    %53 = arith.subf %51, %52 : vector<1x16xf32>
    %cst_33 = arith.constant 0.000000e+00 : f32
    %54 = vector.broadcast %cst_33 : f32 to vector<1x16xf32>
    %55 = arith.maximumf %53, %54 : vector<1x16xf32>
    %56 = vector.broadcast %46 : vector<1x16xf32> to vector<8x16xf32>
    %57 = arith.subf %38, %56 : vector<8x16xf32>
    %cst_34 = arith.constant 9.99999974E-6 : f32
    %58 = vector.broadcast %cst_34 : f32 to vector<1x16xf32>
    %59 = arith.addf %55, %58 : vector<1x16xf32>
    %60 = math.rsqrt %59 : vector<1x16xf32>
    %61 = vector.broadcast %60 : vector<1x16xf32> to vector<8x16xf32>
    %62 = arith.mulf %57, %61 : vector<8x16xf32>
    %63 = vector.broadcast %40 : vector<1x16xf32> to vector<8x16xf32>
    %64 = arith.mulf %62, %63 : vector<8x16xf32>
    %65 = vector.broadcast %42 : vector<1x16xf32> to vector<8x16xf32>
    %66 = arith.addf %64, %65 : vector<8x16xf32>
    %cst_35 = arith.constant 0.000000e+00 : f32
    %67 = vector.broadcast %cst_35 : f32 to vector<8x16xf32>
    %68 = arith.maximumf %66, %67 : vector<8x16xf32>
    %c8_36 = arith.constant 8 : index
    %c0_37 = arith.constant 0 : index
    %69 = vector.load %arg4[%c8_36, %c0_37] : memref<72x16xf32, #tpu.memory_space<vmem>>, vector<8x16xf32>
    tpu.vector_store %arg4[%c8_36, %c0_37], %68 {strides = array<i32>} : memref<72x16xf32, #tpu.memory_space<vmem>>, vector<8x16xf32>,
    %c16 = arith.constant 16 : index
    %c0_38 = arith.constant 0 : index
    %70 = vector.load %arg0[%c16, %c0_38] : memref<72x64xf32, #tpu.memory_space<vmem>>, vector<16x64xf32>
    %c2 = arith.constant 2 : index
    %c0_39 = arith.constant 0 : index
    %c0_40 = arith.constant 0 : index
    %71 = vector.load %arg1[%c2, %c0_39, %c0_40] : memref<4x64x16xf32, #tpu.memory_space<vmem>>, vector<1x64x16xf32>
    %72 = vector.shape_cast %71 : vector<1x64x16xf32> to vector<64x16xf32>
    %cst_41 = arith.constant dense<0.000000e+00> : vector<16x16xf32>
    %73 = tpu.matmul %70, %72, %cst_41 {dimension_numbers = #tpu.dot_dimension_numbers<[1], [0], [0], [1], [0, 0, 1, 1], [], []>} : vector<16x64xf32>, vector<64x16xf32>, vector<16x16xf32> -> vector<16x16xf32>
    %c2_42 = arith.constant 2 : index
    %c0_43 = arith.constant 0 : index
    %c0_44 = arith.constant 0 : index
    %74 = vector.load %arg2[%c2_42, %c0_43, %c0_44] : memref<4x1x16xf32, #tpu.memory_space<vmem>>, vector<1x1x16xf32>
    %75 = vector.shape_cast %74 : vector<1x1x16xf32> to vector<1x16xf32>
    %c2_45 = arith.constant 2 : index
    %c0_46 = arith.constant 0 : index
    %c0_47 = arith.constant 0 : index
    %76 = vector.load %arg3[%c2_45, %c0_46, %c0_47] : memref<4x1x16xf32, #tpu.memory_space<vmem>>, vector<1x1x16xf32>
    %77 = vector.shape_cast %76 : vector<1x1x16xf32> to vector<1x16xf32>
    %cst_48 = arith.constant dense<0.000000e+00> : vector<16xf32>
    %78 = vector.multi_reduction <add>, %73, %cst_48 [0] : vector<16x16xf32> to vector<16xf32>
    %79 = vector.shape_cast %78 : vector<16xf32> to vector<1x16xf32>
    %cst_49 = arith.constant 0.111111112 : f32
    %80 = vector.broadcast %cst_49 : f32 to vector<1x16xf32>
    %81 = arith.mulf %79, %80 : vector<1x16xf32>
    %82 = arith.mulf %73, %73 : vector<16x16xf32>
    %cst_50 = arith.constant dense<0.000000e+00> : vector<16xf32>
    %83 = vector.multi_reduction <add>, %82, %cst_50 [0] : vector<16x16xf32> to vector<16xf32>
    %84 = vector.shape_cast %83 : vector<16xf32> to vector<1x16xf32>
    %cst_51 = arith.constant 0.111111112 : f32
    %85 = vector.broadcast %cst_51 : f32 to vector<1x16xf32>
    %86 = arith.mulf %84, %85 : vector<1x16xf32>
    %87 = arith.mulf %81, %81 : vector<1x16xf32>
    %88 = arith.subf %86, %87 : vector<1x16xf32>
    %cst_52 = arith.constant 0.000000e+00 : f32
    %89 = vector.broadcast %cst_52 : f32 to vector<1x16xf32>
    %90 = arith.maximumf %88, %89 : vector<1x16xf32>
    %91 = vector.broadcast %81 : vector<1x16xf32> to vector<16x16xf32>
    %92 = arith.subf %73, %91 : vector<16x16xf32>
    %cst_53 = arith.constant 9.99999974E-6 : f32
    %93 = vector.broadcast %cst_53 : f32 to vector<1x16xf32>
    %94 = arith.addf %90, %93 : vector<1x16xf32>
    %95 = math.rsqrt %94 : vector<1x16xf32>
    %96 = vector.broadcast %95 : vector<1x16xf32> to vector<16x16xf32>
    %97 = arith.mulf %92, %96 : vector<16x16xf32>
    %98 = vector.broadcast %75 : vector<1x16xf32> to vector<16x16xf32>
    %99 = arith.mulf %97, %98 : vector<16x16xf32>
    %100 = vector.broadcast %77 : vector<1x16xf32> to vector<16x16xf32>
    %101 = arith.addf %99, %100 : vector<16x16xf32>
    %cst_54 = arith.constant 0.000000e+00 : f32
    %102 = vector.broadcast %cst_54 : f32 to vector<16x16xf32>
    %103 = arith.maximumf %101, %102 : vector<16x16xf32>
    %c16_55 = arith.constant 16 : index
    %c0_56 = arith.constant 0 : index
    %104 = vector.load %arg4[%c16_55, %c0_56] : memref<72x16xf32, #tpu.memory_space<vmem>>, vector<16x16xf32>
    tpu.vector_store %arg4[%c16_55, %c0_56], %103 {strides = array<i32>} : memref<72x16xf32, #tpu.memory_space<vmem>>, vector<16x16xf32>,
    %c32 = arith.constant 32 : index
    %c0_57 = arith.constant 0 : index
    %105 = vector.load %arg0[%c32, %c0_57] : memref<72x64xf32, #tpu.memory_space<vmem>>, vector<40x64xf32>
    %c3 = arith.constant 3 : index
    %c0_58 = arith.constant 0 : index
    %c0_59 = arith.constant 0 : index
    %106 = vector.load %arg1[%c3, %c0_58, %c0_59] : memref<4x64x16xf32, #tpu.memory_space<vmem>>, vector<1x64x16xf32>
    %107 = vector.shape_cast %106 : vector<1x64x16xf32> to vector<64x16xf32>
    %cst_60 = arith.constant dense<0.000000e+00> : vector<40x16xf32>
    %108 = tpu.matmul %105, %107, %cst_60 {dimension_numbers = #tpu.dot_dimension_numbers<[1], [0], [0], [1], [0, 0, 1, 1], [], []>} : vector<40x64xf32>, vector<64x16xf32>, vector<40x16xf32> -> vector<40x16xf32>
    %c3_61 = arith.constant 3 : index
    %c0_62 = arith.constant 0 : index
    %c0_63 = arith.constant 0 : index
    %109 = vector.load %arg2[%c3_61, %c0_62, %c0_63] : memref<4x1x16xf32, #tpu.memory_space<vmem>>, vector<1x1x16xf32>
    %110 = vector.shape_cast %109 : vector<1x1x16xf32> to vector<1x16xf32>
    %c3_64 = arith.constant 3 : index
    %c0_65 = arith.constant 0 : index
    %c0_66 = arith.constant 0 : index
    %111 = vector.load %arg3[%c3_64, %c0_65, %c0_66] : memref<4x1x16xf32, #tpu.memory_space<vmem>>, vector<1x1x16xf32>
    %112 = vector.shape_cast %111 : vector<1x1x16xf32> to vector<1x16xf32>
    %cst_67 = arith.constant dense<0.000000e+00> : vector<16xf32>
    %113 = vector.multi_reduction <add>, %108, %cst_67 [0] : vector<40x16xf32> to vector<16xf32>
    %114 = vector.shape_cast %113 : vector<16xf32> to vector<1x16xf32>
    %cst_68 = arith.constant 0.027777778 : f32
    %115 = vector.broadcast %cst_68 : f32 to vector<1x16xf32>
    %116 = arith.mulf %114, %115 : vector<1x16xf32>
    %117 = arith.mulf %108, %108 : vector<40x16xf32>
    %cst_69 = arith.constant dense<0.000000e+00> : vector<16xf32>
    %118 = vector.multi_reduction <add>, %117, %cst_69 [0] : vector<40x16xf32> to vector<16xf32>
    %119 = vector.shape_cast %118 : vector<16xf32> to vector<1x16xf32>
    %cst_70 = arith.constant 0.027777778 : f32
    %120 = vector.broadcast %cst_70 : f32 to vector<1x16xf32>
    %121 = arith.mulf %119, %120 : vector<1x16xf32>
    %122 = arith.mulf %116, %116 : vector<1x16xf32>
    %123 = arith.subf %121, %122 : vector<1x16xf32>
    %cst_71 = arith.constant 0.000000e+00 : f32
    %124 = vector.broadcast %cst_71 : f32 to vector<1x16xf32>
    %125 = arith.maximumf %123, %124 : vector<1x16xf32>
    %126 = vector.broadcast %116 : vector<1x16xf32> to vector<40x16xf32>
    %127 = arith.subf %108, %126 : vector<40x16xf32>
    %cst_72 = arith.constant 9.99999974E-6 : f32
    %128 = vector.broadcast %cst_72 : f32 to vector<1x16xf32>
    %129 = arith.addf %125, %128 : vector<1x16xf32>
    %130 = math.rsqrt %129 : vector<1x16xf32>
    %131 = vector.broadcast %130 : vector<1x16xf32> to vector<40x16xf32>
    %132 = arith.mulf %127, %131 : vector<40x16xf32>
    %133 = vector.broadcast %110 : vector<1x16xf32> to vector<40x16xf32>
    %134 = arith.mulf %132, %133 : vector<40x16xf32>
    %135 = vector.broadcast %112 : vector<1x16xf32> to vector<40x16xf32>
    %136 = arith.addf %134, %135 : vector<40x16xf32>
    %cst_73 = arith.constant 0.000000e+00 : f32
    %137 = vector.broadcast %cst_73 : f32 to vector<40x16xf32>
    %138 = arith.maximumf %136, %137 : vector<40x16xf32>
    %c32_74 = arith.constant 32 : index
    %c0_75 = arith.constant 0 : index
    %139 = vector.load %arg4[%c32_74, %c0_75] : memref<72x16xf32, #tpu.memory_space<vmem>>, vector<40x16xf32>
    tpu.vector_store %arg4[%c32_74, %c0_75], %138 {strides = array<i32>} : memref<72x16xf32, #tpu.memory_space<vmem>>, vector<40x16xf32>,
    return
  }
}

module attributes {stable_mosaic.version = 11 : i64} {
  func.func @_projector_gap_kernel(%arg0: memref<16x128xf32, #tpu.memory_space<vmem>>, %arg1: memref<128x128xf32, #tpu.memory_space<vmem>>, %arg2: memref<1x128xf32, #tpu.memory_space<vmem>>, %arg3: memref<1x128xf32, #tpu.memory_space<vmem>>, %arg4: memref<128x128xf32, #tpu.memory_space<vmem>>, %arg5: memref<1x128xf32, #tpu.memory_space<vmem>>, %arg6: memref<1x128xf32, #tpu.memory_space<vmem>>, %arg7: memref<128x128xf32, #tpu.memory_space<vmem>>, %arg8: memref<1x128xf32, #tpu.memory_space<vmem>>, %arg9: memref<1x128xf32, #tpu.memory_space<vmem>>, %arg10: memref<19x16xf32, #tpu.memory_space<vmem>>, %arg11: memref<19x128xf32, #tpu.memory_space<vmem>>) attributes {dimension_semantics = [], scalar_prefetch = 0 : i64, scratch_operands = 0 : i64, tpu.core_type = #tpu.core_type<tc>} {
    %c0 = arith.constant 0 : index
    %c0_0 = arith.constant 0 : index
    %0 = vector.load %arg0[%c0, %c0_0] : memref<16x128xf32, #tpu.memory_space<vmem>>, vector<16x128xf32>
    %c0_1 = arith.constant 0 : index
    %c0_2 = arith.constant 0 : index
    %1 = vector.load %arg1[%c0_1, %c0_2] : memref<128x128xf32, #tpu.memory_space<vmem>>, vector<128x128xf32>
    %cst = arith.constant dense<0.000000e+00> : vector<16x128xf32>
    %2 = tpu.matmul %0, %1, %cst {dimension_numbers = #tpu.dot_dimension_numbers<[1], [0], [0], [1], [0, 0, 1, 1], [], []>} : vector<16x128xf32>, vector<128x128xf32>, vector<16x128xf32> -> vector<16x128xf32>
    %c0_3 = arith.constant 0 : index
    %c0_4 = arith.constant 0 : index
    %3 = vector.load %arg2[%c0_3, %c0_4] : memref<1x128xf32, #tpu.memory_space<vmem>>, vector<1x128xf32>
    %c0_5 = arith.constant 0 : index
    %c0_6 = arith.constant 0 : index
    %4 = vector.load %arg3[%c0_5, %c0_6] : memref<1x128xf32, #tpu.memory_space<vmem>>, vector<1x128xf32>
    %cst_7 = arith.constant dense<0.000000e+00> : vector<128xf32>
    %5 = vector.multi_reduction <add>, %2, %cst_7 [0] : vector<16x128xf32> to vector<128xf32>
    %6 = vector.shape_cast %5 : vector<128xf32> to vector<1x128xf32>
    %cst_8 = arith.constant 6.250000e-02 : f32
    %7 = vector.broadcast %cst_8 : f32 to vector<1x128xf32>
    %8 = arith.mulf %6, %7 : vector<1x128xf32>
    %9 = arith.mulf %2, %2 : vector<16x128xf32>
    %cst_9 = arith.constant dense<0.000000e+00> : vector<128xf32>
    %10 = vector.multi_reduction <add>, %9, %cst_9 [0] : vector<16x128xf32> to vector<128xf32>
    %11 = vector.shape_cast %10 : vector<128xf32> to vector<1x128xf32>
    %cst_10 = arith.constant 6.250000e-02 : f32
    %12 = vector.broadcast %cst_10 : f32 to vector<1x128xf32>
    %13 = arith.mulf %11, %12 : vector<1x128xf32>
    %14 = arith.mulf %8, %8 : vector<1x128xf32>
    %15 = arith.subf %13, %14 : vector<1x128xf32>
    %cst_11 = arith.constant 0.000000e+00 : f32
    %16 = vector.broadcast %cst_11 : f32 to vector<1x128xf32>
    %17 = arith.maximumf %15, %16 : vector<1x128xf32>
    %18 = vector.broadcast %8 : vector<1x128xf32> to vector<16x128xf32>
    %19 = arith.subf %2, %18 : vector<16x128xf32>
    %cst_12 = arith.constant 9.99999974E-6 : f32
    %20 = vector.broadcast %cst_12 : f32 to vector<1x128xf32>
    %21 = arith.addf %17, %20 : vector<1x128xf32>
    %22 = math.rsqrt %21 : vector<1x128xf32>
    %23 = vector.broadcast %22 : vector<1x128xf32> to vector<16x128xf32>
    %24 = arith.mulf %19, %23 : vector<16x128xf32>
    %25 = vector.broadcast %3 : vector<1x128xf32> to vector<16x128xf32>
    %26 = arith.mulf %24, %25 : vector<16x128xf32>
    %27 = vector.broadcast %4 : vector<1x128xf32> to vector<16x128xf32>
    %28 = arith.addf %26, %27 : vector<16x128xf32>
    %cst_13 = arith.constant 0.000000e+00 : f32
    %29 = vector.broadcast %cst_13 : f32 to vector<16x128xf32>
    %30 = arith.maximumf %28, %29 : vector<16x128xf32>
    %c0_14 = arith.constant 0 : index
    %c0_15 = arith.constant 0 : index
    %31 = vector.load %arg4[%c0_14, %c0_15] : memref<128x128xf32, #tpu.memory_space<vmem>>, vector<128x128xf32>
    %cst_16 = arith.constant dense<0.000000e+00> : vector<16x128xf32>
    %32 = tpu.matmul %30, %31, %cst_16 {dimension_numbers = #tpu.dot_dimension_numbers<[1], [0], [0], [1], [0, 0, 1, 1], [], []>} : vector<16x128xf32>, vector<128x128xf32>, vector<16x128xf32> -> vector<16x128xf32>
    %c0_17 = arith.constant 0 : index
    %c0_18 = arith.constant 0 : index
    %33 = vector.load %arg5[%c0_17, %c0_18] : memref<1x128xf32, #tpu.memory_space<vmem>>, vector<1x128xf32>
    %c0_19 = arith.constant 0 : index
    %c0_20 = arith.constant 0 : index
    %34 = vector.load %arg6[%c0_19, %c0_20] : memref<1x128xf32, #tpu.memory_space<vmem>>, vector<1x128xf32>
    %cst_21 = arith.constant dense<0.000000e+00> : vector<128xf32>
    %35 = vector.multi_reduction <add>, %32, %cst_21 [0] : vector<16x128xf32> to vector<128xf32>
    %36 = vector.shape_cast %35 : vector<128xf32> to vector<1x128xf32>
    %cst_22 = arith.constant 6.250000e-02 : f32
    %37 = vector.broadcast %cst_22 : f32 to vector<1x128xf32>
    %38 = arith.mulf %36, %37 : vector<1x128xf32>
    %39 = arith.mulf %32, %32 : vector<16x128xf32>
    %cst_23 = arith.constant dense<0.000000e+00> : vector<128xf32>
    %40 = vector.multi_reduction <add>, %39, %cst_23 [0] : vector<16x128xf32> to vector<128xf32>
    %41 = vector.shape_cast %40 : vector<128xf32> to vector<1x128xf32>
    %cst_24 = arith.constant 6.250000e-02 : f32
    %42 = vector.broadcast %cst_24 : f32 to vector<1x128xf32>
    %43 = arith.mulf %41, %42 : vector<1x128xf32>
    %44 = arith.mulf %38, %38 : vector<1x128xf32>
    %45 = arith.subf %43, %44 : vector<1x128xf32>
    %cst_25 = arith.constant 0.000000e+00 : f32
    %46 = vector.broadcast %cst_25 : f32 to vector<1x128xf32>
    %47 = arith.maximumf %45, %46 : vector<1x128xf32>
    %48 = vector.broadcast %38 : vector<1x128xf32> to vector<16x128xf32>
    %49 = arith.subf %32, %48 : vector<16x128xf32>
    %cst_26 = arith.constant 9.99999974E-6 : f32
    %50 = vector.broadcast %cst_26 : f32 to vector<1x128xf32>
    %51 = arith.addf %47, %50 : vector<1x128xf32>
    %52 = math.rsqrt %51 : vector<1x128xf32>
    %53 = vector.broadcast %52 : vector<1x128xf32> to vector<16x128xf32>
    %54 = arith.mulf %49, %53 : vector<16x128xf32>
    %55 = vector.broadcast %33 : vector<1x128xf32> to vector<16x128xf32>
    %56 = arith.mulf %54, %55 : vector<16x128xf32>
    %57 = vector.broadcast %34 : vector<1x128xf32> to vector<16x128xf32>
    %58 = arith.addf %56, %57 : vector<16x128xf32>
    %cst_27 = arith.constant 0.000000e+00 : f32
    %59 = vector.broadcast %cst_27 : f32 to vector<16x128xf32>
    %60 = arith.maximumf %58, %59 : vector<16x128xf32>
    %c0_28 = arith.constant 0 : index
    %c0_29 = arith.constant 0 : index
    %61 = vector.load %arg7[%c0_28, %c0_29] : memref<128x128xf32, #tpu.memory_space<vmem>>, vector<128x128xf32>
    %cst_30 = arith.constant dense<0.000000e+00> : vector<16x128xf32>
    %62 = tpu.matmul %60, %61, %cst_30 {dimension_numbers = #tpu.dot_dimension_numbers<[1], [0], [0], [1], [0, 0, 1, 1], [], []>} : vector<16x128xf32>, vector<128x128xf32>, vector<16x128xf32> -> vector<16x128xf32>
    %c0_31 = arith.constant 0 : index
    %c0_32 = arith.constant 0 : index
    %63 = vector.load %arg8[%c0_31, %c0_32] : memref<1x128xf32, #tpu.memory_space<vmem>>, vector<1x128xf32>
    %c0_33 = arith.constant 0 : index
    %c0_34 = arith.constant 0 : index
    %64 = vector.load %arg9[%c0_33, %c0_34] : memref<1x128xf32, #tpu.memory_space<vmem>>, vector<1x128xf32>
    %cst_35 = arith.constant dense<0.000000e+00> : vector<128xf32>
    %65 = vector.multi_reduction <add>, %62, %cst_35 [0] : vector<16x128xf32> to vector<128xf32>
    %66 = vector.shape_cast %65 : vector<128xf32> to vector<1x128xf32>
    %cst_36 = arith.constant 6.250000e-02 : f32
    %67 = vector.broadcast %cst_36 : f32 to vector<1x128xf32>
    %68 = arith.mulf %66, %67 : vector<1x128xf32>
    %69 = arith.mulf %62, %62 : vector<16x128xf32>
    %cst_37 = arith.constant dense<0.000000e+00> : vector<128xf32>
    %70 = vector.multi_reduction <add>, %69, %cst_37 [0] : vector<16x128xf32> to vector<128xf32>
    %71 = vector.shape_cast %70 : vector<128xf32> to vector<1x128xf32>
    %cst_38 = arith.constant 6.250000e-02 : f32
    %72 = vector.broadcast %cst_38 : f32 to vector<1x128xf32>
    %73 = arith.mulf %71, %72 : vector<1x128xf32>
    %74 = arith.mulf %68, %68 : vector<1x128xf32>
    %75 = arith.subf %73, %74 : vector<1x128xf32>
    %cst_39 = arith.constant 0.000000e+00 : f32
    %76 = vector.broadcast %cst_39 : f32 to vector<1x128xf32>
    %77 = arith.maximumf %75, %76 : vector<1x128xf32>
    %78 = vector.broadcast %68 : vector<1x128xf32> to vector<16x128xf32>
    %79 = arith.subf %62, %78 : vector<16x128xf32>
    %cst_40 = arith.constant 9.99999974E-6 : f32
    %80 = vector.broadcast %cst_40 : f32 to vector<1x128xf32>
    %81 = arith.addf %77, %80 : vector<1x128xf32>
    %82 = math.rsqrt %81 : vector<1x128xf32>
    %83 = vector.broadcast %82 : vector<1x128xf32> to vector<16x128xf32>
    %84 = arith.mulf %79, %83 : vector<16x128xf32>
    %85 = vector.broadcast %63 : vector<1x128xf32> to vector<16x128xf32>
    %86 = arith.mulf %84, %85 : vector<16x128xf32>
    %87 = vector.broadcast %64 : vector<1x128xf32> to vector<16x128xf32>
    %88 = arith.addf %86, %87 : vector<16x128xf32>
    %c0_41 = arith.constant 0 : index
    %c0_42 = arith.constant 0 : index
    %89 = vector.load %arg10[%c0_41, %c0_42] : memref<19x16xf32, #tpu.memory_space<vmem>>, vector<19x16xf32>
    %cst_43 = arith.constant dense<0.000000e+00> : vector<19x128xf32>
    %90 = tpu.matmul %89, %88, %cst_43 {dimension_numbers = #tpu.dot_dimension_numbers<[1], [0], [0], [1], [0, 0, 1, 1], [], []>} : vector<19x16xf32>, vector<16x128xf32>, vector<19x128xf32> -> vector<19x128xf32>
    %cst_44 = arith.constant dense<0.000000e+00> : vector<19xf32>
    %91 = vector.multi_reduction <add>, %89, %cst_44 [1] : vector<19x16xf32> to vector<19xf32>
    %92 = vector.shape_cast %91 : vector<19xf32> to vector<19x1xf32>
    %cst_45 = arith.constant 5.000000e-04 : f32
    %93 = vector.broadcast %cst_45 : f32 to vector<19x1xf32>
    %94 = arith.addf %92, %93 : vector<19x1xf32>
    %95 = vector.broadcast %94 : vector<19x1xf32> to vector<19x128xf32>
    %96 = arith.divf %90, %95 : vector<19x128xf32>
    %c0_46 = arith.constant 0 : index
    %c0_47 = arith.constant 0 : index
    %97 = vector.load %arg11[%c0_46, %c0_47] : memref<19x128xf32, #tpu.memory_space<vmem>>, vector<19x128xf32>
    tpu.vector_store %arg11[%c0_46, %c0_47], %96 {strides = array<i32>} : memref<19x128xf32, #tpu.memory_space<vmem>>, vector<19x128xf32>,
    return
  }
}

</mosaic_0001>

<llo_original>
// kernel: _device_forward.2
$region0: #{_device_forward.2}
  #allocation0 [shape = 'u32[]', space=smem, size = 0x4, offset = 0x4, fixed_abs, tag = 'smem constant byte address 0x4 - core index']
  #allocation1 [shape = 'u32[144,128]{1,0:T(1,128)}', space=vmem, size = 0x12000, scoped, tag = 'internal scratch']
  %s0 = inlined_call_operand.vmem [shape: f32[72,64], index: 0, kind: input, shape index: {}]
  %s1 = inlined_call_operand.vmem [shape: f32[4,64,16], index: 1, kind: input, shape index: {}]
  %s2 = inlined_call_operand.vmem [shape: f32[4,1,16], index: 2, kind: input, shape index: {}]
  %s3 = inlined_call_operand.vmem [shape: f32[4,1,16], index: 3, kind: input, shape index: {}]
  %s4 = inlined_call_operand.vmem [shape: f32[72,16], index: 4, kind: output, shape index: {}]
  %s5 = sld [smem:[#allocation0]]
  $region26: #{_device_forward.2} parent=0
    _
  %s7 = ssub.s32 1, %s5
  %s8 = scalar_select 0, %s7, %s5
  // Predicated region
  $region2: #{_device_forward.2} parent=0 // pred_check
    _
  $region3: #{_device_forward.2} parent=0 // pred_check_branch
    %10 = sbr.rel (0) target = $region5
  $region4: #{_device_forward.2} parent=0 // pred_region
    _
  $region5: #{_device_forward.2} parent=0 // pred_fallthru
    _
  // Predicated region
  $region6: #{_device_forward.2} parent=0 // pred_check
    _
  $region7: #{_device_forward.2} parent=0 // pred_check_branch
    %12 = sbr.rel (0) target = $region9
  $region8: #{_device_forward.2} parent=0 // pred_region
    _
  $region9: #{_device_forward.2} parent=0 // pred_fallthru
    _
  // Predicated region
  $region10: #{_device_forward.2} parent=0 // pred_check
    _
  $region11: #{_device_forward.2} parent=0 // pred_check_branch
    %14 = sbr.rel (0) target = $region13
  $region12: #{_device_forward.2} parent=0 // pred_region
    _
  $region13: #{_device_forward.2} parent=0 // pred_fallthru
    _
  // Predicated region
  $region14: #{_device_forward.2} parent=0 // pred_check
    _
  $region15: #{_device_forward.2} parent=0 // pred_check_branch
    %16 = sbr.rel (0) target = $region17
  $region16: #{_device_forward.2} parent=0 // pred_region
    _
  $region17: #{_device_forward.2} parent=0 // pred_fallthru
    _
  %v17 = vld [vmem:[%s0] sm:$0xff]
  %v18 = vld [vmem:[%s1] sm:$0xff]
  %v19 = vld [vmem:[%s1 + $0x8] sm:$0xff]
  %v20 = vld [vmem:[%s1 + $0x10] sm:$0xff]
  %v21 = vld [vmem:[%s1 + $0x18] sm:$0xff]
  %v22 = vld [vmem:[%s1 + $0x20] sm:$0xff]
  %v23 = vld [vmem:[%s1 + $0x28] sm:$0xff]
  %v24 = vld [vmem:[%s1 + $0x30] sm:$0xff]
  %v25 = vld [vmem:[%s1 + $0x38] sm:$0xff]
  %vm26 = vcmask 523264
  %v28 = vsel %vm26, %v17, 0
  %30 = vmatprep.subr.mxu0 0.0
  %31 = vmatpush1.msra.mxu0 %v18
  %32 = vmatprep.subr.mxu0 0.0
  %33 = vmatpush1.msra.mxu0 %v19
  %34 = vmatprep.subr.mxu0 0.0
  %35 = vmatpush1.msra.mxu0 %v20
  %36 = vmatprep.subr.mxu0 0.0
  %37 = vmatpush1.msra.mxu0 %v21
  %38 = vmatprep.subr.mxu0 0.0
  %39 = vmatpush1.msra.mxu0 %v22
  %40 = vmatprep.subr.mxu0 0.0
  %41 = vmatpush1.msra.mxu0 %v23
  %42 = vmatprep.subr.mxu0 0.0
  %43 = vmatpush1.msra.mxu0 %v24
  %44 = vmatprep.subr.mxu0 0.0
  %45 = vmatpush1.msra.mxu0 %v25
  %46 = vmatprep.subr.mxu0 0.0
  %47 = vmatpush1.msra.mxu0 0.0
  %48 = vmatprep.subr.mxu0 0.0
  %49 = vmatpush1.msra.mxu0 0.0
  %50 = vmatprep.subr.mxu0 0.0
  %51 = vmatpush1.msra.mxu0 0.0
  %52 = vmatprep.subr.mxu0 0.0
  %53 = vmatpush1.msra.mxu0 0.0
  %54 = vmatprep.subr.mxu0 0.0
  %55 = vmatpush1.msra.mxu0 0.0
  %56 = vmatprep.subr.mxu0 0.0
  %57 = vmatpush1.msra.mxu0 0.0
  %58 = vmatprep.subr.mxu0 0.0
  %59 = vmatpush1.msra.mxu0 0.0
  %60 = vmatprep.subr.mxu0 0.0
  %61 = vmatpush1.msra.mxu0 0.0
  %62 = vmatprep.subr.mxu0 0.0
  %63 = vmatpush1.msra.mxu0 0.0
  %64 = vmatprep.subr.mxu0 0.0
  %65 = vmatpush1.msra.mxu0 0.0
  %66 = vmatprep.subr.mxu0 0.0
  %67 = vmatpush1.msra.mxu0 0.0
  %68 = vmatprep.subr.mxu0 0.0
  %69 = vmatpush1.msra.mxu0 0.0
  %70 = vmatprep.subr.mxu0 0.0
  %71 = vmatpush1.msra.mxu0 0.0
  %72 = vmatprep.subr.mxu0 0.0
  %73 = vmatpush1.msra.mxu0 0.0
  %74 = vmatprep.subr.mxu0 0.0
  %75 = vmatpush1.msra.mxu0 0.0
  %76 = vmatprep.subr.mxu0 0.0
  %77 = vmatpush1.msra.mxu0 0.0
  %78 = vmatprep.subr.mxu0 0.0
  %79 = vmatpush1.msra.mxu0 0.0
  %80 = vmatprep.subr.mxu0 0.0
  %81 = vmatpush1.msra.mxu0 0.0
  %82 = vmatprep.subr.mxu0 0.0
  %83 = vmatpush1.msra.mxu0 0.0
  %84 = vmatprep.subr.mxu0 0.0
  %85 = vmatpush1.msra.mxu0 0.0
  %86 = vmatprep.subr.mxu0 0.0
  %87 = vmatpush1.msra.mxu0 0.0
  %88 = vmatprep.subr.mxu0 0.0
  %89 = vmatpush1.msra.mxu0 0.0
  %90 = vmatprep.subr.mxu0 0.0
  %91 = vmatpush1.msra.mxu0 0.0
  %92 = vmatprep.subr.mxu0 0.0
  %93 = vmatpush1.msra.mxu0 0.0
  %94 = vmatprep.mubr.f32.mxu0 0.0
  %95 = vmatmul.mubr.f32.gmra.mrb[0].mxu0 %v28
  %v96 = vpop.f32.mrb[0].mxu0
  %v97 = vadd.f32 0.0, %v96
  %v98 = vpop.f32.mrb[0].mxu0
  %99 = vdwg.mxu0
  %v100 = vld [vmem:[%s2] sm:$0x1]
  %v101 = vld [vmem:[%s3] sm:$0x1]
  %vm102 = vcmask 130048
  %v103 = vsel %vm102, %v97, 0.0
  %v104 = vrot.slane %v103, 4
  %v105 = vadd.f32 %v103, %v104
  %v106 = vrot.slane %v105, 2
  %v107 = vadd.f32 %v105, %v106
  %v108 = vrot.slane %v107, 1
  %v109 = vadd.f32 %v107, %v108
  %v110 = vmul.f32 %v97, %v97
  %v111 = vsel %vm102, %v110, 0.0
  %v112 = vrot.slane %v111, 4
  %v113 = vadd.f32 %v111, %v112
  %v114 = vrot.slane %v113, 2
  %v115 = vadd.f32 %v113, %v114
  %v116 = vrot.slane %v115, 1
  %v117 = vadd.f32 %v115, %v116
  %v118 = vmul.f32 %v109, %v109
  %v119 = vsub.f32 %v117, %v118
  %v120 = vmax.f32 %v119, 0.0
  %v121 = vsub.f32 %v97, %v109
  %v122 = vadd.f32 %v120, 1e-05
  %v123 = vrsqrt.pop %v122
  %v124 = vmul.f32 %v121, %v123
  %v126 = vlaneseq
  %v127 = vshrl.u32 %v126, 7
  %v128 = vsub.s32 0, %v127
  %v129 = vrot.slane %v100, %v128
  %v131 = vmul.f32 %v124, %v129
  %v133 = vlaneseq
  %v134 = vshrl.u32 %v133, 7
  %v135 = vsub.s32 0, %v134
  %v136 = vrot.slane %v101, %v135
  %v138 = vadd.f32 %v131, %v136
  %v139 = vmax.f32 %v138, 0.0
  %140 = vst.msk [vmem:[%s4] sm:$0xff] %vm102, %v139
  %v141 = vld [vmem:[%s0 + $0x8] sm:$0xff]
  %s142 = scalar_lea.vmem %s1, 64
  %v143 = vld [vmem:[%s142] sm:$0xff]
  %v144 = vld [vmem:[%s142 + $0x8] sm:$0xff]
  %v145 = vld [vmem:[%s142 + $0x10] sm:$0xff]
  %v146 = vld [vmem:[%s142 + $0x18] sm:$0xff]
  %v147 = vld [vmem:[%s142 + $0x20] sm:$0xff]
  %v148 = vld [vmem:[%s142 + $0x28] sm:$0xff]
  %v149 = vld [vmem:[%s142 + $0x30] sm:$0xff]
  %v150 = vld [vmem:[%s142 + $0x38] sm:$0xff]
  %v152 = vsel %vm26, %v141, 0
  %154 = vmatprep.subr.mxu0 0.0
  %155 = vmatpush1.msra.mxu0 %v143
  %156 = vmatprep.subr.mxu0 0.0
  %157 = vmatpush1.msra.mxu0 %v144
  %158 = vmatprep.subr.mxu0 0.0
  %159 = vmatpush1.msra.mxu0 %v145
  %160 = vmatprep.subr.mxu0 0.0
  %161 = vmatpush1.msra.mxu0 %v146
  %162 = vmatprep.subr.mxu0 0.0
  %163 = vmatpush1.msra.mxu0 %v147
  %164 = vmatprep.subr.mxu0 0.0
  %165 = vmatpush1.msra.mxu0 %v148
  %166 = vmatprep.subr.mxu0 0.0
  %167 = vmatpush1.msra.mxu0 %v149
  %168 = vmatprep.subr.mxu0 0.0
  %169 = vmatpush1.msra.mxu0 %v150
  %170 = vmatprep.subr.mxu0 0.0
  %171 = vmatpush1.msra.mxu0 0.0
  %172 = vmatprep.subr.mxu0 0.0
  %173 = vmatpush1.msra.mxu0 0.0
  %174 = vmatprep.subr.mxu0 0.0
  %175 = vmatpush1.msra.mxu0 0.0
  %176 = vmatprep.subr.mxu0 0.0
  %177 = vmatpush1.msra.mxu0 0.0
  %178 = vmatprep.subr.mxu0 0.0
  %179 = vmatpush1.msra.mxu0 0.0
  %180 = vmatprep.subr.mxu0 0.0
  %181 = vmatpush1.msra.mxu0 0.0
  %182 = vmatprep.subr.mxu0 0.0
  %183 = vmatpush1.msra.mxu0 0.0
  %184 = vmatprep.subr.mxu0 0.0
  %185 = vmatpush1.msra.mxu0 0.0
  %186 = vmatprep.subr.mxu0 0.0
  %187 = vmatpush1.msra.mxu0 0.0
  %188 = vmatprep.subr.mxu0 0.0
  %189 = vmatpush1.msra.mxu0 0.0
  %190 = vmatprep.subr.mxu0 0.0
  %191 = vmatpush1.msra.mxu0 0.0
  %192 = vmatprep.subr.mxu0 0.0
  %193 = vmatpush1.msra.mxu0 0.0
  %194 = vmatprep.subr.mxu0 0.0
  %195 = vmatpush1.msra.mxu0 0.0
  %196 = vmatprep.subr.mxu0 0.0
  %197 = vmatpush1.msra.mxu0 0.0
  %198 = vmatprep.subr.mxu0 0.0
  %199 = vmatpush1.msra.mxu0 0.0
  %200 = vmatprep.subr.mxu0 0.0
  %201 = vmatpush1.msra.mxu0 0.0
  %202 = vmatprep.subr.mxu0 0.0
  %203 = vmatpush1.msra.mxu0 0.0
  %204 = vmatprep.subr.mxu0 0.0
  %205 = vmatpush1.msra.mxu0 0.0
  %206 = vmatprep.subr.mxu0 0.0
  %207 = vmatpush1.msra.mxu0 0.0
  %208 = vmatprep.subr.mxu0 0.0
  %209 = vmatpush1.msra.mxu0 0.0
  %210 = vmatprep.subr.mxu0 0.0
  %211 = vmatpush1.msra.mxu0 0.0
  %212 = vmatprep.subr.mxu0 0.0
  %213 = vmatpush1.msra.mxu0 0.0
  %214 = vmatprep.subr.mxu0 0.0
  %215 = vmatpush1.msra.mxu0 0.0
  %216 = vmatprep.subr.mxu0 0.0
  %217 = vmatpush1.msra.mxu0 0.0
  %218 = vmatprep.mubr.f32.mxu0 0.0
  %219 = vmatmul.mubr.f32.gmra.mrb[0].mxu0 %v152
  %v220 = vpop.f32.mrb[0].mxu0
  %v221 = vadd.f32 0.0, %v220
  %v222 = vpop.f32.mrb[0].mxu0
  %223 = vdwg.mxu0
  %s224 = scalar_lea.vmem %s2, 1
  %v225 = vld [vmem:[%s224] sm:$0x1]
  %s226 = scalar_lea.vmem %s3, 1
  %v227 = vld [vmem:[%s226] sm:$0x1]
  %v228 = vsel %vm102, %v221, 0.0
  %v229 = vrot.slane %v228, 4
  %v230 = vadd.f32 %v228, %v229
  %v231 = vrot.slane %v230, 2
  %v232 = vadd.f32 %v230, %v231
  %v233 = vrot.slane %v232, 1
  %v234 = vadd.f32 %v232, %v233
  %v235 = vmul.f32 %v234, 0.25
  %v236 = vmul.f32 %v221, %v221
  %v237 = vsel %vm102, %v236, 0.0
  %v238 = vrot.slane %v237, 4
  %v239 = vadd.f32 %v237, %v238
  %v240 = vrot.slane %v239, 2
  %v241 = vadd.f32 %v239, %v240
  %v242 = vrot.slane %v241, 1
  %v243 = vadd.f32 %v241, %v242
  %v244 = vmul.f32 %v243, 0.25
  %v245 = vmul.f32 %v235, %v235
  %v246 = vsub.f32 %v244, %v245
  %v247 = vmax.f32 %v246, 0.0
  %v248 = vsub.f32 %v221, %v235
  %v249 = vadd.f32 %v247, 1e-05
  %v250 = vrsqrt.pop %v249
  %v251 = vmul.f32 %v248, %v250
  %v253 = vlaneseq
  %v254 = vshrl.u32 %v253, 7
  %v255 = vsub.s32 0, %v254
  %v256 = vrot.slane %v225, %v255
  %v258 = vmul.f32 %v251, %v256
  %v260 = vlaneseq
  %v261 = vshrl.u32 %v260, 7
  %v262 = vsub.s32 0, %v261
  %v263 = vrot.slane %v227, %v262
  %v265 = vadd.f32 %v258, %v263
  %v266 = vmax.f32 %v265, 0.0
  %267 = vst.msk [vmem:[%s4 + $0x8] sm:$0xff] %vm102, %v266
  %v268 = vld [vmem:[%s0 + $0x10] sm:$0xff]
  %v269 = vld [vmem:[%s0 + $0x18] sm:$0xff]
  %s270 = scalar_lea.vmem %s1, 128
  %v271 = vld [vmem:[%s270] sm:$0xff]
  %v272 = vld [vmem:[%s270 + $0x8] sm:$0xff]
  %v273 = vld [vmem:[%s270 + $0x10] sm:$0xff]
  %v274 = vld [vmem:[%s270 + $0x18] sm:$0xff]
  %v275 = vld [vmem:[%s270 + $0x20] sm:$0xff]
  %v276 = vld [vmem:[%s270 + $0x28] sm:$0xff]
  %v277 = vld [vmem:[%s270 + $0x30] sm:$0xff]
  %v278 = vld [vmem:[%s270 + $0x38] sm:$0xff]
  %v280 = vsel %vm26, %v268, 0
  %v283 = vsel %vm26, %v269, 0
  %285 = vmatprep.subr.mxu0 0.0
  %286 = vmatpush1.msra.mxu0 %v271
  %287 = vmatprep.subr.mxu0 0.0
  %288 = vmatpush1.msra.mxu0 %v272
  %289 = vmatprep.subr.mxu0 0.0
  %290 = vmatpush1.msra.mxu0 %v273
  %291 = vmatprep.subr.mxu0 0.0
  %292 = vmatpush1.msra.mxu0 %v274
  %293 = vmatprep.subr.mxu0 0.0
  %294 = vmatpush1.msra.mxu0 %v275
  %295 = vmatprep.subr.mxu0 0.0
  %296 = vmatpush1.msra.mxu0 %v276
  %297 = vmatprep.subr.mxu0 0.0
  %298 = vmatpush1.msra.mxu0 %v277
  %299 = vmatprep.subr.mxu0 0.0
  %300 = vmatpush1.msra.mxu0 %v278
  %301 = vmatprep.subr.mxu0 0.0
  %302 = vmatpush1.msra.mxu0 0.0
  %303 = vmatprep.subr.mxu0 0.0
  %304 = vmatpush1.msra.mxu0 0.0
  %305 = vmatprep.subr.mxu0 0.0
  %306 = vmatpush1.msra.mxu0 0.0
  %307 = vmatprep.subr.mxu0 0.0
  %308 = vmatpush1.msra.mxu0 0.0
  %309 = vmatprep.subr.mxu0 0.0
  %310 = vmatpush1.msra.mxu0 0.0
  %311 = vmatprep.subr.mxu0 0.0
  %312 = vmatpush1.msra.mxu0 0.0
  %313 = vmatprep.subr.mxu0 0.0
  %314 = vmatpush1.msra.mxu0 0.0
  %315 = vmatprep.subr.mxu0 0.0
  %316 = vmatpush1.msra.mxu0 0.0
  %317 = vmatprep.subr.mxu0 0.0
  %318 = vmatpush1.msra.mxu0 0.0
  %319 = vmatprep.subr.mxu0 0.0
  %320 = vmatpush1.msra.mxu0 0.0
  %321 = vmatprep.subr.mxu0 0.0
  %322 = vmatpush1.msra.mxu0 0.0
  %323 = vmatprep.subr.mxu0 0.0
  %324 = vmatpush1.msra.mxu0 0.0
  %325 = vmatprep.subr.mxu0 0.0
  %326 = vmatpush1.msra.mxu0 0.0
  %327 = vmatprep.subr.mxu0 0.0
  %328 = vmatpush1.msra.mxu0 0.0
  %329 = vmatprep.subr.mxu0 0.0
  %330 = vmatpush1.msra.mxu0 0.0
  %331 = vmatprep.subr.mxu0 0.0
  %332 = vmatpush1.msra.mxu0 0.0
  %333 = vmatprep.subr.mxu0 0.0
  %334 = vmatpush1.msra.mxu0 0.0
  %335 = vmatprep.subr.mxu0 0.0
  %336 = vmatpush1.msra.mxu0 0.0
  %337 = vmatprep.subr.mxu0 0.0
  %338 = vmatpush1.msra.mxu0 0.0
  %339 = vmatprep.subr.mxu0 0.0
  %340 = vmatpush1.msra.mxu0 0.0
  %341 = vmatprep.subr.mxu0 0.0
  %342 = vmatpush1.msra.mxu0 0.0
  %343 = vmatprep.subr.mxu0 0.0
  %344 = vmatpush1.msra.mxu0 0.0
  %345 = vmatprep.subr.mxu0 0.0
  %346 = vmatpush1.msra.mxu0 0.0
  %347 = vmatprep.subr.mxu0 0.0
  %348 = vmatpush1.msra.mxu0 0.0
  %349 = vmatprep.mubr.f32.mxu0 0.0
  %350 = vmatmul.mubr.f32.gmra.mrb[0].mxu0 %v280
  %v351 = vpop.f32.mrb[0].mxu0
  %v352 = vadd.f32 0.0, %v351
  %v353 = vpop.f32.mrb[0].mxu0
  %354 = vmatprep.mubr.f32.mxu0 0.0
  %355 = vmatmul.mubr.f32.gmra.mrb[0].mxu0 %v283
  %v356 = vpop.f32.mrb[0].mxu0
  %v357 = vadd.f32 0.0, %v356
  %v358 = vpop.f32.mrb[0].mxu0
  %359 = vdwg.mxu0
  %s360 = scalar_lea.vmem %s2, 2
  %v361 = vld [vmem:[%s360] sm:$0x1]
  %s362 = scalar_lea.vmem %s3, 2
  %v363 = vld [vmem:[%s362] sm:$0x1]
  %v364 = vsel %vm102, %v352, 0.0
  %v365 = vsel %vm102, %v357, 0.0
  %v366 = vadd.f32 %v364, %v365
  %v367 = vrot.slane %v366, 4
  %v368 = vadd.f32 %v366, %v367
  %v369 = vrot.slane %v368, 2
  %v370 = vadd.f32 %v368, %v369
  %v371 = vrot.slane %v370, 1
  %v372 = vadd.f32 %v370, %v371
  %v373 = vmul.f32 %v372, 0.11111111
  %v374 = vmul.f32 %v352, %v352
  %v375 = vmul.f32 %v357, %v357
  %v376 = vsel %vm102, %v374, 0.0
  %v377 = vsel %vm102, %v375, 0.0
  %v378 = vadd.f32 %v376, %v377
  %v379 = vrot.slane %v378, 4
  %v380 = vadd.f32 %v378, %v379
  %v381 = vrot.slane %v380, 2
  %v382 = vadd.f32 %v380, %v381
  %v383 = vrot.slane %v382, 1
  %v384 = vadd.f32 %v382, %v383
  %v385 = vmul.f32 %v384, 0.11111111
  %v386 = vmul.f32 %v373, %v373
  %v387 = vsub.f32 %v385, %v386
  %v388 = vmax.f32 %v387, 0.0
  %v389 = vsub.f32 %v352, %v373
  %v390 = vsub.f32 %v357, %v373
  %v391 = vadd.f32 %v388, 1e-05
  %v392 = vrsqrt.pop %v391
  %v393 = vmul.f32 %v389, %v392
  %v394 = vmul.f32 %v390, %v392
  %v396 = vlaneseq
  %v397 = vshrl.u32 %v396, 7
  %v398 = vsub.s32 0, %v397
  %v399 = vrot.slane %v361, %v398
  %v401 = vmul.f32 %v393, %v399
  %v402 = vmul.f32 %v394, %v399
  %v404 = vlaneseq
  %v405 = vshrl.u32 %v404, 7
  %v406 = vsub.s32 0, %v405
  %v407 = vrot.slane %v363, %v406
  %v409 = vadd.f32 %v401, %v407
  %v410 = vadd.f32 %v402, %v407
  %v411 = vmax.f32 %v409, 0.0
  %v412 = vmax.f32 %v410, 0.0
  %413 = vst.msk [vmem:[%s4 + $0x10] sm:$0xff] %vm102, %v411
  %414 = vst.msk [vmem:[%s4 + $0x18] sm:$0xff] %vm102, %v412
  %v415 = vld [vmem:[%s0 + $0x20] sm:$0xff]
  %v416 = vld [vmem:[%s0 + $0x28] sm:$0xff]
  %v417 = vld [vmem:[%s0 + $0x30] sm:$0xff]
  %v418 = vld [vmem:[%s0 + $0x38] sm:$0xff]
  %v419 = vld [vmem:[%s0 + $0x40] sm:$0xff]
  %s420 = scalar_lea.vmem %s1, 192
  %v421 = vld [vmem:[%s420] sm:$0xff]
  %v422 = vld [vmem:[%s420 + $0x8] sm:$0xff]
  %v423 = vld [vmem:[%s420 + $0x10] sm:$0xff]
  %v424 = vld [vmem:[%s420 + $0x18] sm:$0xff]
  %v425 = vld [vmem:[%s420 + $0x20] sm:$0xff]
  %v426 = vld [vmem:[%s420 + $0x28] sm:$0xff]
  %v427 = vld [vmem:[%s420 + $0x30] sm:$0xff]
  %v428 = vld [vmem:[%s420 + $0x38] sm:$0xff]
  %v430 = vsel %vm26, %v415, 0
  %v433 = vsel %vm26, %v416, 0
  %v436 = vsel %vm26, %v417, 0
  %v439 = vsel %vm26, %v418, 0
  %v442 = vsel %vm26, %v419, 0
  %444 = vmatprep.subr.mxu0 0.0
  %445 = vmatpush1.msra.mxu0 %v421
  %446 = vmatprep.subr.mxu0 0.0
  %447 = vmatpush1.msra.mxu0 %v422
  %448 = vmatprep.subr.mxu0 0.0
  %449 = vmatpush1.msra.mxu0 %v423
  %450 = vmatprep.subr.mxu0 0.0
  %451 = vmatpush1.msra.mxu0 %v424
  %452 = vmatprep.subr.mxu0 0.0
  %453 = vmatpush1.msra.mxu0 %v425
  %454 = vmatprep.subr.mxu0 0.0
  %455 = vmatpush1.msra.mxu0 %v426
  %456 = vmatprep.subr.mxu0 0.0
  %457 = vmatpush1.msra.mxu0 %v427
  %458 = vmatprep.subr.mxu0 0.0
  %459 = vmatpush1.msra.mxu0 %v428
  %460 = vmatprep.subr.mxu0 0.0
  %461 = vmatpush1.msra.mxu0 0.0
  %462 = vmatprep.subr.mxu0 0.0
  %463 = vmatpush1.msra.mxu0 0.0
  %464 = vmatprep.subr.mxu0 0.0
  %465 = vmatpush1.msra.mxu0 0.0
  %466 = vmatprep.subr.mxu0 0.0
  %467 = vmatpush1.msra.mxu0 0.0
  %468 = vmatprep.subr.mxu0 0.0
  %469 = vmatpush1.msra.mxu0 0.0
  %470 = vmatprep.subr.mxu0 0.0
  %471 = vmatpush1.msra.mxu0 0.0
  %472 = vmatprep.subr.mxu0 0.0
  %473 = vmatpush1.msra.mxu0 0.0
  %474 = vmatprep.subr.mxu0 0.0
  %475 = vmatpush1.msra.mxu0 0.0
  %476 = vmatprep.subr.mxu0 0.0
  %477 = vmatpush1.msra.mxu0 0.0
  %478 = vmatprep.subr.mxu0 0.0
  %479 = vmatpush1.msra.mxu0 0.0
  %480 = vmatprep.subr.mxu0 0.0
  %481 = vmatpush1.msra.mxu0 0.0
  %482 = vmatprep.subr.mxu0 0.0
  %483 = vmatpush1.msra.mxu0 0.0
  %484 = vmatprep.subr.mxu0 0.0
  %485 = vmatpush1.msra.mxu0 0.0
  %486 = vmatprep.subr.mxu0 0.0
  %487 = vmatpush1.msra.mxu0 0.0
  %488 = vmatprep.subr.mxu0 0.0
  %489 = vmatpush1.msra.mxu0 0.0
  %490 = vmatprep.subr.mxu0 0.0
  %491 = vmatpush1.msra.mxu0 0.0
  %492 = vmatprep.subr.mxu0 0.0
  %493 = vmatpush1.msra.mxu0 0.0
  %494 = vmatprep.subr.mxu0 0.0
  %495 = vmatpush1.msra.mxu0 0.0
  %496 = vmatprep.subr.mxu0 0.0
  %497 = vmatpush1.msra.mxu0 0.0
  %498 = vmatprep.subr.mxu0 0.0
  %499 = vmatpush1.msra.mxu0 0.0
  %500 = vmatprep.subr.mxu0 0.0
  %501 = vmatpush1.msra.mxu0 0.0
  %502 = vmatprep.subr.mxu0 0.0
  %503 = vmatpush1.msra.mxu0 0.0
  %504 = vmatprep.subr.mxu0 0.0
  %505 = vmatpush1.msra.mxu0 0.0
  %506 = vmatprep.subr.mxu0 0.0
  %507 = vmatpush1.msra.mxu0 0.0
  %508 = vmatprep.mubr.f32.mxu0 0.0
  %509 = vmatmul.mubr.f32.gmra.mrb[0].mxu0 %v430
  %v510 = vpop.f32.mrb[0].mxu0
  %v511 = vadd.f32 0.0, %v510
  %v512 = vpop.f32.mrb[0].mxu0
  %513 = vmatprep.mubr.f32.mxu0 0.0
  %514 = vmatmul.mubr.f32.gmra.mrb[0].mxu0 %v433
  %v515 = vpop.f32.mrb[0].mxu0
  %v516 = vadd.f32 0.0, %v515
  %v517 = vpop.f32.mrb[0].mxu0
  %518 = vmatprep.mubr.f32.mxu0 0.0
  %519 = vmatmul.mubr.f32.gmra.mrb[0].mxu0 %v436
  %v520 = vpop.f32.mrb[0].mxu0
  %v521 = vadd.f32 0.0, %v520
  %v522 = vpop.f32.mrb[0].mxu0
  %523 = vmatprep.mubr.f32.mxu0 0.0
  %524 = vmatmul.mubr.f32.gmra.mrb[0].mxu0 %v439
  %v525 = vpop.f32.mrb[0].mxu0
  %v526 = vadd.f32 0.0, %v525
  %v527 = vpop.f32.mrb[0].mxu0
  %528 = vmatprep.mubr.f32.mxu0 0.0
  %529 = vmatmul.mubr.f32.gmra.mrb[0].mxu0 %v442
  %v530 = vpop.f32.mrb[0].mxu0
  %v531 = vadd.f32 0.0, %v530
  %v532 = vpop.f32.mrb[0].mxu0
  %533 = vdwg.mxu0
  %s534 = scalar_lea.vmem %s2, 3
  %v535 = vld [vmem:[%s534] sm:$0x1]
  %s536 = scalar_lea.vmem %s3, 3
  %v537 = vld [vmem:[%s536] sm:$0x1]
  %v538 = vsel %vm102, %v511, 0.0
  %v539 = vsel %vm102, %v516, 0.0
  %v540 = vadd.f32 %v538, %v539
  %v541 = vsel %vm102, %v521, 0.0
  %v542 = vadd.f32 %v540, %v541
  %v543 = vsel %vm102, %v526, 0.0
  %v544 = vadd.f32 %v542, %v543
  %v545 = vsel %vm102, %v531, 0.0
  %v546 = vadd.f32 %v544, %v545
  %v547 = vrot.slane %v546, 4
  %v548 = vadd.f32 %v546, %v547
  %v549 = vrot.slane %v548, 2
  %v550 = vadd.f32 %v548, %v549
  %v551 = vrot.slane %v550, 1
  %v552 = vadd.f32 %v550, %v551
  %v553 = vmul.f32 %v552, 0.027777778
  %v554 = vmul.f32 %v511, %v511
  %v555 = vmul.f32 %v516, %v516
  %v556 = vmul.f32 %v521, %v521
  %v557 = vmul.f32 %v526, %v526
  %v558 = vmul.f32 %v531, %v531
  %v559 = vsel %vm102, %v554, 0.0
  %v560 = vsel %vm102, %v555, 0.0
  %v561 = vadd.f32 %v559, %v560
  %v562 = vsel %vm102, %v556, 0.0
  %v563 = vadd.f32 %v561, %v562
  %v564 = vsel %vm102, %v557, 0.0
  %v565 = vadd.f32 %v563, %v564
  %v566 = vsel %vm102, %v558, 0.0
  %v567 = vadd.f32 %v565, %v566
  %v568 = vrot.slane %v567, 4
  %v569 = vadd.f32 %v567, %v568
  %v570 = vrot.slane %v569, 2
  %v571 = vadd.f32 %v569, %v570
  %v572 = vrot.slane %v571, 1
  %v573 = vadd.f32 %v571, %v572
  %v574 = vmul.f32 %v573, 0.027777778
  %v575 = vmul.f32 %v553, %v553
  %v576 = vsub.f32 %v574, %v575
  %v577 = vmax.f32 %v576, 0.0
  %v578 = vsub.f32 %v511, %v553
  %v579 = vsub.f32 %v516, %v553
  %v580 = vsub.f32 %v521, %v553
  %v581 = vsub.f32 %v526, %v553
  %v582 = vsub.f32 %v531, %v553
  %v583 = vadd.f32 %v577, 1e-05
  %v584 = vrsqrt.pop %v583
  %v585 = vmul.f32 %v578, %v584
  %v586 = vmul.f32 %v579, %v584
  %v587 = vmul.f32 %v580, %v584
  %v588 = vmul.f32 %v581, %v584
  %v589 = vmul.f32 %v582, %v584
  %v591 = vlaneseq
  %v592 = vshrl.u32 %v591, 7
  %v593 = vsub.s32 0, %v592
  %v594 = vrot.slane %v535, %v593
  %v596 = vmul.f32 %v585, %v594
  %v597 = vmul.f32 %v586, %v594
  %v598 = vmul.f32 %v587, %v594
  %v599 = vmul.f32 %v588, %v594
  %v600 = vmul.f32 %v589, %v594
  %v602 = vlaneseq
  %v603 = vshrl.u32 %v602, 7
  %v604 = vsub.s32 0, %v603
  %v605 = vrot.slane %v537, %v604
  %v607 = vadd.f32 %v596, %v605
  %v608 = vadd.f32 %v597, %v605
  %v609 = vadd.f32 %v598, %v605
  %v610 = vadd.f32 %v599, %v605
  %v611 = vadd.f32 %v600, %v605
  %v612 = vmax.f32 %v607, 0.0
  %v613 = vmax.f32 %v608, 0.0
  %v614 = vmax.f32 %v609, 0.0
  %v615 = vmax.f32 %v610, 0.0
  %v616 = vmax.f32 %v611, 0.0
  %617 = vst.msk [vmem:[%s4 + $0x20] sm:$0xff] %vm102, %v612
  %618 = vst.msk [vmem:[%s4 + $0x28] sm:$0xff] %vm102, %v613
  %619 = vst.msk [vmem:[%s4 + $0x30] sm:$0xff] %vm102, %v614
  %620 = vst.msk [vmem:[%s4 + $0x38] sm:$0xff] %vm102, %v615
  %621 = vst.msk [vmem:[%s4 + $0x40] sm:$0xff] %vm102, %v616
  // Predicated region
  $region18: #{_device_forward.2} parent=0 // pred_check
    _
  $region19: #{_device_forward.2} parent=0 // pred_check_branch
    %623 = sbr.rel (0) target = $region21
  $region20: #{_device_forward.2} parent=0 // pred_region
    _
  $region21: #{_device_forward.2} parent=0 // pred_fallthru
    _
  // Predicated region
  $region22: #{_device_forward.2} parent=0 // pred_check
    _
  $region23: #{_device_forward.2} parent=0 // pred_check_branch
    %625 = sbr.rel (0) target = $region25
  $region24: #{_device_forward.2} parent=0 // pred_region
    _
  $region25: #{_device_forward.2} parent=0 // pred_fallthru
    _

// kernel: _device_forward.3
$region0: #{_device_forward.3}
  #allocation0 [shape = 'u32[]', space=smem, size = 0x4, offset = 0x4, fixed_abs, tag = 'smem constant byte address 0x4 - core index']
  #allocation1 [shape = 'u32[144,128]{1,0:T(1,128)}', space=vmem, size = 0x12000, scoped, tag = 'internal scratch']
  %s0 = inlined_call_operand.vmem [shape: f32[16,128], index: 0, kind: input, shape index: {}]
  %s1 = inlined_call_operand.vmem [shape: f32[128,128], index: 1, kind: input, shape index: {}]
  %s2 = inlined_call_operand.vmem [shape: f32[1,128], index: 2, kind: input, shape index: {}]
  %s3 = inlined_call_operand.vmem [shape: f32[1,128], index: 3, kind: input, shape index: {}]
  %s4 = inlined_call_operand.vmem [shape: f32[128,128], index: 4, kind: input, shape index: {}]
  %s5 = inlined_call_operand.vmem [shape: f32[1,128], index: 5, kind: input, shape index: {}]
  %s6 = inlined_call_operand.vmem [shape: f32[1,128], index: 6, kind: input, shape index: {}]
  %s7 = inlined_call_operand.vmem [shape: f32[128,128], index: 7, kind: input, shape index: {}]
  %s8 = inlined_call_operand.vmem [shape: f32[1,128], index: 8, kind: input, shape index: {}]
  %s9 = inlined_call_operand.vmem [shape: f32[1,128], index: 9, kind: input, shape index: {}]
  %s10 = inlined_call_operand.vmem [shape: f32[19,16], index: 10, kind: input, shape index: {}]
  %s11 = inlined_call_operand.hbm [shape: f32[19,128], index: 11, kind: output, shape index: {}]
  %s12 = sld [smem:[#allocation0]]
  $region54: #{_device_forward.3} parent=0
    _
  %s14 = ssub.s32 1, %s12
  %s15 = scalar_select 0, %s14, %s12
  $region1: #{_device_forward.3} parent=0
    #allocation2 [shape = 'u8[12288]{0}', space=vmem, size = 0x3000, scoped, tag = 'output window, operand 0, single buffered']
    #allocation3 [shape = 's32[1]{0}', space=sflag, size = 0x4, scoped, tag = 'scoped memory for _device_forward.3']
    %16 = vsyncpa [#allocation3], 0
    // Predicated region
    $region2: #{_device_forward.3} parent=1 // pred_check
      _
    $region3: #{_device_forward.3} parent=1 // pred_check_branch
      %18 = sbr.rel (0) target = $region5
    $region4: #{_device_forward.3} parent=1 // pred_region
      _
    $region5: #{_device_forward.3} parent=1 // pred_fallthru
      _
    // Predicated region
    $region6: #{_device_forward.3} parent=1 // pred_check
      _
    $region7: #{_device_forward.3} parent=1 // pred_check_branch
      %20 = sbr.rel (0) target = $region9
    $region8: #{_device_forward.3} parent=1 // pred_region
      _
    $region9: #{_device_forward.3} parent=1 // pred_fallthru
      _
    // Predicated region
    $region10: #{_device_forward.3} parent=1 // pred_check
      _
    $region11: #{_device_forward.3} parent=1 // pred_check_branch
      %22 = sbr.rel (0) target = $region13
    $region12: #{_device_forward.3} parent=1 // pred_region
      _
    $region13: #{_device_forward.3} parent=1 // pred_fallthru
      _
    // Predicated region
    $region14: #{_device_forward.3} parent=1 // pred_check
      _
    $region15: #{_device_forward.3} parent=1 // pred_check_branch
      %24 = sbr.rel (0) target = $region17
    $region16: #{_device_forward.3} parent=1 // pred_region
      _
    $region17: #{_device_forward.3} parent=1 // pred_fallthru
      _
    // Predicated region
    $region18: #{_device_forward.3} parent=1 // pred_check
      _
    $region19: #{_device_forward.3} parent=1 // pred_check_branch
      %26 = sbr.rel (0) target = $region21
    $region20: #{_device_forward.3} parent=1 // pred_region
      _
    $region21: #{_device_forward.3} parent=1 // pred_fallthru
      _
    // Predicated region
    $region22: #{_device_forward.3} parent=1 // pred_check
      _
    $region23: #{_device_forward.3} parent=1 // pred_check_branch
      %28 = sbr.rel (0) target = $region25
    $region24: #{_device_forward.3} parent=1 // pred_region
      _
    $region25: #{_device_forward.3} parent=1 // pred_fallthru
      _
    // Predicated region
    $region26: #{_device_forward.3} parent=1 // pred_check
      _
    $region27: #{_device_forward.3} parent=1 // pred_check_branch
      %30 = sbr.rel (0) target = $region29
    $region28: #{_device_forward.3} parent=1 // pred_region
      _
    $region29: #{_device_forward.3} parent=1 // pred_fallthru
      _
    // Predicated region
    $region30: #{_device_forward.3} parent=1 // pred_check
      _
    $region31: #{_device_forward.3} parent=1 // pred_check_branch
      %32 = sbr.rel (0) target = $region33
    $region32: #{_device_forward.3} parent=1 // pred_region
      _
    $region33: #{_device_forward.3} parent=1 // pred_fallthru
      _
    // Predicated region
    $region34: #{_device_forward.3} parent=1 // pred_check
      _
    $region35: #{_device_forward.3} parent=1 // pred_check_branch
      %34 = sbr.rel (0) target = $region37
    $region36: #{_device_forward.3} parent=1 // pred_region
      _
    $region37: #{_device_forward.3} parent=1 // pred_fallthru
      _
    // Predicated region
    $region38: #{_device_forward.3} parent=1 // pred_check
      _
    $region39: #{_device_forward.3} parent=1 // pred_check_branch
      %36 = sbr.rel (0) target = $region41
    $region40: #{_device_forward.3} parent=1 // pred_region
      _
    $region41: #{_device_forward.3} parent=1 // pred_fallthru
      _
    // Predicated region
    $region42: #{_device_forward.3} parent=1 // pred_check
      _
    $region43: #{_device_forward.3} parent=1 // pred_check_branch
      %38 = sbr.rel (0) target = $region45
    $region44: #{_device_forward.3} parent=1 // pred_region
      _
    $region45: #{_device_forward.3} parent=1 // pred_fallthru
      _
    %v39 = vld [vmem:[%s0] sm:$0xff]
    %v40 = vld [vmem:[%s0 + $0x8] sm:$0xff]
    %v41 = vld [vmem:[%s1] sm:$0xff]
    %v42 = vld [vmem:[%s1 + $0x8] sm:$0xff]
    %v43 = vld [vmem:[%s1 + $0x10] sm:$0xff]
    %v44 = vld [vmem:[%s1 + $0x18] sm:$0xff]
    %v45 = vld [vmem:[%s1 + $0x20] sm:$0xff]
    %v46 = vld [vmem:[%s1 + $0x28] sm:$0xff]
    %v47 = vld [vmem:[%s1 + $0x30] sm:$0xff]
    %v48 = vld [vmem:[%s1 + $0x38] sm:$0xff]
    %v49 = vld [vmem:[%s1 + $0x40] sm:$0xff]
    %v50 = vld [vmem:[%s1 + $0x48] sm:$0xff]
    %v51 = vld [vmem:[%s1 + $0x50] sm:$0xff]
    %v52 = vld [vmem:[%s1 + $0x58] sm:$0xff]
    %v53 = vld [vmem:[%s1 + $0x60] sm:$0xff]
    %v54 = vld [vmem:[%s1 + $0x68] sm:$0xff]
    %v55 = vld [vmem:[%s1 + $0x70] sm:$0xff]
    %v56 = vld [vmem:[%s1 + $0x78] sm:$0xff]
    %57 = vmatprep.subr.mxu0 0.0
    %58 = vmatpush1.msra.mxu0 %v41
    %59 = vmatprep.subr.mxu0 0.0
    %60 = vmatpush1.msra.mxu0 %v42
    %61 = vmatprep.subr.mxu0 0.0
    %62 = vmatpush1.msra.mxu0 %v43
    %63 = vmatprep.subr.mxu0 0.0
    %64 = vmatpush1.msra.mxu0 %v44
    %65 = vmatprep.subr.mxu0 0.0
    %66 = vmatpush1.msra.mxu0 %v45
    %67 = vmatprep.subr.mxu0 0.0
    %68 = vmatpush1.msra.mxu0 %v46
    %69 = vmatprep.subr.mxu0 0.0
    %70 = vmatpush1.msra.mxu0 %v47
    %71 = vmatprep.subr.mxu0 0.0
    %72 = vmatpush1.msra.mxu0 %v48
    %73 = vmatprep.subr.mxu0 0.0
    %74 = vmatpush1.msra.mxu0 %v49
    %75 = vmatprep.subr.mxu0 0.0
    %76 = vmatpush1.msra.mxu0 %v50
    %77 = vmatprep.subr.mxu0 0.0
    %78 = vmatpush1.msra.mxu0 %v51
    %79 = vmatprep.subr.mxu0 0.0
    %80 = vmatpush1.msra.mxu0 %v52
    %81 = vmatprep.subr.mxu0 0.0
    %82 = vmatpush1.msra.mxu0 %v53
    %83 = vmatprep.subr.mxu0 0.0
    %84 = vmatpush1.msra.mxu0 %v54
    %85 = vmatprep.subr.mxu0 0.0
    %86 = vmatpush1.msra.mxu0 %v55
    %87 = vmatprep.subr.mxu0 0.0
    %88 = vmatpush1.msra.mxu0 %v56
    %89 = vmatprep.subr.mxu0 0.0
    %90 = vmatpush1.msra.mxu0 0.0
    %91 = vmatprep.subr.mxu0 0.0
    %92 = vmatpush1.msra.mxu0 0.0
    %93 = vmatprep.subr.mxu0 0.0
    %94 = vmatpush1.msra.mxu0 0.0
    %95 = vmatprep.subr.mxu0 0.0
    %96 = vmatpush1.msra.mxu0 0.0
    %97 = vmatprep.subr.mxu0 0.0
    %98 = vmatpush1.msra.mxu0 0.0
    %99 = vmatprep.subr.mxu0 0.0
    %100 = vmatpush1.msra.mxu0 0.0
    %101 = vmatprep.subr.mxu0 0.0
    %102 = vmatpush1.msra.mxu0 0.0
    %103 = vmatprep.subr.mxu0 0.0
    %104 = vmatpush1.msra.mxu0 0.0
    %105 = vmatprep.subr.mxu0 0.0
    %106 = vmatpush1.msra.mxu0 0.0
    %107 = vmatprep.subr.mxu0 0.0
    %108 = vmatpush1.msra.mxu0 0.0
    %109 = vmatprep.subr.mxu0 0.0
    %110 = vmatpush1.msra.mxu0 0.0
    %111 = vmatprep.subr.mxu0 0.0
    %112 = vmatpush1.msra.mxu0 0.0
    %113 = vmatprep.subr.mxu0 0.0
    %114 = vmatpush1.msra.mxu0 0.0
    %115 = vmatprep.subr.mxu0 0.0
    %116 = vmatpush1.msra.mxu0 0.0
    %117 = vmatprep.subr.mxu0 0.0
    %118 = vmatpush1.msra.mxu0 0.0
    %119 = vmatprep.subr.mxu0 0.0
    %120 = vmatpush1.msra.mxu0 0.0
    %121 = vmatprep.mubr.f32.mxu0 0.0
    %122 = vmatmul.mubr.f32.gmra.mrb[0].mxu0 %v39
    %v123 = vpop.f32.mrb[0].mxu0
    %v124 = vadd.f32 0.0, %v123
    %v125 = vpop.f32.mrb[0].mxu0
    %126 = vmatprep.mubr.f32.mxu0 0.0
    %127 = vmatmul.mubr.f32.gmra.mrb[0].mxu0 %v40
    %v128 = vpop.f32.mrb[0].mxu0
    %v129 = vadd.f32 0.0, %v128
    %v130 = vpop.f32.mrb[0].mxu0
    %131 = vdwg.mxu0
    %v132 = vld [vmem:[%s2] sm:$0x1]
    %v133 = vld [vmem:[%s3] sm:$0x1]
    %v134 = vadd.f32 %v124, %v129
    %v135 = vrot.slane %v134, 4
    %v136 = vadd.f32 %v134, %v135
    %v137 = vrot.slane %v136, 2
    %v138 = vadd.f32 %v136, %v137
    %v139 = vrot.slane %v138, 1
    %v140 = vadd.f32 %v138, %v139
    %v141 = vmul.f32 %v140, 0.0625
    %v142 = vmul.f32 %v124, %v124
    %v143 = vmul.f32 %v129, %v129
    %v144 = vadd.f32 %v142, %v143
    %v145 = vrot.slane %v144, 4
    %v146 = vadd.f32 %v144, %v145
    %v147 = vrot.slane %v146, 2
    %v148 = vadd.f32 %v146, %v147
    %v149 = vrot.slane %v148, 1
    %v150 = vadd.f32 %v148, %v149
    %v151 = vmul.f32 %v150, 0.0625
    %v152 = vmul.f32 %v141, %v141
    %v153 = vsub.f32 %v151, %v152
    %v154 = vmax.f32 %v153, 0.0
    %v155 = vsub.f32 %v124, %v141
    %v156 = vsub.f32 %v129, %v141
    %v157 = vadd.f32 %v154, 1e-05
    %v158 = vrsqrt.pop %v157
    %v159 = vmul.f32 %v155, %v158
    %v160 = vmul.f32 %v156, %v158
    %v162 = vlaneseq
    %v163 = vshrl.u32 %v162, 7
    %v164 = vsub.s32 0, %v163
    %v165 = vrot.slane %v132, %v164
    %v167 = vmul.f32 %v159, %v165
    %v168 = vmul.f32 %v160, %v165
    %v170 = vlaneseq
    %v171 = vshrl.u32 %v170, 7
    %v172 = vsub.s32 0, %v171
    %v173 = vrot.slane %v133, %v172
    %v175 = vadd.f32 %v167, %v173
    %v176 = vadd.f32 %v168, %v173
    %v177 = vmax.f32 %v175, 0.0
    %v178 = vmax.f32 %v176, 0.0
    %v179 = vld [vmem:[%s4] sm:$0xff]
    %v180 = vld [vmem:[%s4 + $0x8] sm:$0xff]
    %v181 = vld [vmem:[%s4 + $0x10] sm:$0xff]
    %v182 = vld [vmem:[%s4 + $0x18] sm:$0xff]
    %v183 = vld [vmem:[%s4 + $0x20] sm:$0xff]
    %v184 = vld [vmem:[%s4 + $0x28] sm:$0xff]
    %v185 = vld [vmem:[%s4 + $0x30] sm:$0xff]
    %v186 = vld [vmem:[%s4 + $0x38] sm:$0xff]
    %v187 = vld [vmem:[%s4 + $0x40] sm:$0xff]
    %v188 = vld [vmem:[%s4 + $0x48] sm:$0xff]
    %v189 = vld [vmem:[%s4 + $0x50] sm:$0xff]
    %v190 = vld [vmem:[%s4 + $0x58] sm:$0xff]
    %v191 = vld [vmem:[%s4 + $0x60] sm:$0xff]
    %v192 = vld [vmem:[%s4 + $0x68] sm:$0xff]
    %v193 = vld [vmem:[%s4 + $0x70] sm:$0xff]
    %v194 = vld [vmem:[%s4 + $0x78] sm:$0xff]
    %195 = vmatprep.subr.mxu0 0.0
    %196 = vmatpush1.msra.mxu0 %v179
    %197 = vmatprep.subr.mxu0 0.0
    %198 = vmatpush1.msra.mxu0 %v180
    %199 = vmatprep.subr.mxu0 0.0
    %200 = vmatpush1.msra.mxu0 %v181
    %201 = vmatprep.subr.mxu0 0.0
    %202 = vmatpush1.msra.mxu0 %v182
    %203 = vmatprep.subr.mxu0 0.0
    %204 = vmatpush1.msra.mxu0 %v183
    %205 = vmatprep.subr.mxu0 0.0
    %206 = vmatpush1.msra.mxu0 %v184
    %207 = vmatprep.subr.mxu0 0.0
    %208 = vmatpush1.msra.mxu0 %v185
    %209 = vmatprep.subr.mxu0 0.0
    %210 = vmatpush1.msra.mxu0 %v186
    %211 = vmatprep.subr.mxu0 0.0
    %212 = vmatpush1.msra.mxu0 %v187
    %213 = vmatprep.subr.mxu0 0.0
    %214 = vmatpush1.msra.mxu0 %v188
    %215 = vmatprep.subr.mxu0 0.0
    %216 = vmatpush1.msra.mxu0 %v189
    %217 = vmatprep.subr.mxu0 0.0
    %218 = vmatpush1.msra.mxu0 %v190
    %219 = vmatprep.subr.mxu0 0.0
    %220 = vmatpush1.msra.mxu0 %v191
    %221 = vmatprep.subr.mxu0 0.0
    %222 = vmatpush1.msra.mxu0 %v192
    %223 = vmatprep.subr.mxu0 0.0
    %224 = vmatpush1.msra.mxu0 %v193
    %225 = vmatprep.subr.mxu0 0.0
    %226 = vmatpush1.msra.mxu0 %v194
    %227 = vmatprep.subr.mxu0 0.0
    %228 = vmatpush1.msra.mxu0 0.0
    %229 = vmatprep.subr.mxu0 0.0
    %230 = vmatpush1.msra.mxu0 0.0
    %231 = vmatprep.subr.mxu0 0.0
    %232 = vmatpush1.msra.mxu0 0.0
    %233 = vmatprep.subr.mxu0 0.0
    %234 = vmatpush1.msra.mxu0 0.0
    %235 = vmatprep.subr.mxu0 0.0
    %236 = vmatpush1.msra.mxu0 0.0
    %237 = vmatprep.subr.mxu0 0.0
    %238 = vmatpush1.msra.mxu0 0.0
    %239 = vmatprep.subr.mxu0 0.0
    %240 = vmatpush1.msra.mxu0 0.0
    %241 = vmatprep.subr.mxu0 0.0
    %242 = vmatpush1.msra.mxu0 0.0
    %243 = vmatprep.subr.mxu0 0.0
    %244 = vmatpush1.msra.mxu0 0.0
    %245 = vmatprep.subr.mxu0 0.0
    %246 = vmatpush1.msra.mxu0 0.0
    %247 = vmatprep.subr.mxu0 0.0
    %248 = vmatpush1.msra.mxu0 0.0
    %249 = vmatprep.subr.mxu0 0.0
    %250 = vmatpush1.msra.mxu0 0.0
    %251 = vmatprep.subr.mxu0 0.0
    %252 = vmatpush1.msra.mxu0 0.0
    %253 = vmatprep.subr.mxu0 0.0
    %254 = vmatpush1.msra.mxu0 0.0
    %255 = vmatprep.subr.mxu0 0.0
    %256 = vmatpush1.msra.mxu0 0.0
    %257 = vmatprep.subr.mxu0 0.0
    %258 = vmatpush1.msra.mxu0 0.0
    %259 = vmatprep.mubr.f32.mxu0 0.0
    %260 = vmatmul.mubr.f32.gmra.mrb[0].mxu0 %v177
    %v261 = vpop.f32.mrb[0].mxu0
    %v262 = vadd.f32 0.0, %v261
    %v263 = vpop.f32.mrb[0].mxu0
    %264 = vmatprep.mubr.f32.mxu0 0.0
    %265 = vmatmul.mubr.f32.gmra.mrb[0].mxu0 %v178
    %v266 = vpop.f32.mrb[0].mxu0
    %v267 = vadd.f32 0.0, %v266
    %v268 = vpop.f32.mrb[0].mxu0
    %269 = vdwg.mxu0
    %v270 = vld [vmem:[%s5] sm:$0x1]
    %v271 = vld [vmem:[%s6] sm:$0x1]
    %v272 = vadd.f32 %v262, %v267
    %v273 = vrot.slane %v272, 4
    %v274 = vadd.f32 %v272, %v273
    %v275 = vrot.slane %v274, 2
    %v276 = vadd.f32 %v274, %v275
    %v277 = vrot.slane %v276, 1
    %v278 = vadd.f32 %v276, %v277
    %v279 = vmul.f32 %v278, 0.0625
    %v280 = vmul.f32 %v262, %v262
    %v281 = vmul.f32 %v267, %v267
    %v282 = vadd.f32 %v280, %v281
    %v283 = vrot.slane %v282, 4
    %v284 = vadd.f32 %v282, %v283
    %v285 = vrot.slane %v284, 2
    %v286 = vadd.f32 %v284, %v285
    %v287 = vrot.slane %v286, 1
    %v288 = vadd.f32 %v286, %v287
    %v289 = vmul.f32 %v288, 0.0625
    %v290 = vmul.f32 %v279, %v279
    %v291 = vsub.f32 %v289, %v290
    %v292 = vmax.f32 %v291, 0.0
    %v293 = vsub.f32 %v262, %v279
    %v294 = vsub.f32 %v267, %v279
    %v295 = vadd.f32 %v292, 1e-05
    %v296 = vrsqrt.pop %v295
    %v297 = vmul.f32 %v293, %v296
    %v298 = vmul.f32 %v294, %v296
    %v300 = vlaneseq
    %v301 = vshrl.u32 %v300, 7
    %v302 = vsub.s32 0, %v301
    %v303 = vrot.slane %v270, %v302
    %v305 = vmul.f32 %v297, %v303
    %v306 = vmul.f32 %v298, %v303
    %v308 = vlaneseq
    %v309 = vshrl.u32 %v308, 7
    %v310 = vsub.s32 0, %v309
    %v311 = vrot.slane %v271, %v310
    %v313 = vadd.f32 %v305, %v311
    %v314 = vadd.f32 %v306, %v311
    %v315 = vmax.f32 %v313, 0.0
    %v316 = vmax.f32 %v314, 0.0
    %v317 = vld [vmem:[%s7] sm:$0xff]
    %v318 = vld [vmem:[%s7 + $0x8] sm:$0xff]
    %v319 = vld [vmem:[%s7 + $0x10] sm:$0xff]
    %v320 = vld [vmem:[%s7 + $0x18] sm:$0xff]
    %v321 = vld [vmem:[%s7 + $0x20] sm:$0xff]
    %v322 = vld [vmem:[%s7 + $0x28] sm:$0xff]
    %v323 = vld [vmem:[%s7 + $0x30] sm:$0xff]
    %v324 = vld [vmem:[%s7 + $0x38] sm:$0xff]
    %v325 = vld [vmem:[%s7 + $0x40] sm:$0xff]
    %v326 = vld [vmem:[%s7 + $0x48] sm:$0xff]
    %v327 = vld [vmem:[%s7 + $0x50] sm:$0xff]
    %v328 = vld [vmem:[%s7 + $0x58] sm:$0xff]
    %v329 = vld [vmem:[%s7 + $0x60] sm:$0xff]
    %v330 = vld [vmem:[%s7 + $0x68] sm:$0xff]
    %v331 = vld [vmem:[%s7 + $0x70] sm:$0xff]
    %v332 = vld [vmem:[%s7 + $0x78] sm:$0xff]
    %333 = vmatprep.subr.mxu0 0.0
    %334 = vmatpush1.msra.mxu0 %v317
    %335 = vmatprep.subr.mxu0 0.0
    %336 = vmatpush1.msra.mxu0 %v318
    %337 = vmatprep.subr.mxu0 0.0
    %338 = vmatpush1.msra.mxu0 %v319
    %339 = vmatprep.subr.mxu0 0.0
    %340 = vmatpush1.msra.mxu0 %v320
    %341 = vmatprep.subr.mxu0 0.0
    %342 = vmatpush1.msra.mxu0 %v321
    %343 = vmatprep.subr.mxu0 0.0
    %344 = vmatpush1.msra.mxu0 %v322
    %345 = vmatprep.subr.mxu0 0.0
    %346 = vmatpush1.msra.mxu0 %v323
    %347 = vmatprep.subr.mxu0 0.0
    %348 = vmatpush1.msra.mxu0 %v324
    %349 = vmatprep.subr.mxu0 0.0
    %350 = vmatpush1.msra.mxu0 %v325
    %351 = vmatprep.subr.mxu0 0.0
    %352 = vmatpush1.msra.mxu0 %v326
    %353 = vmatprep.subr.mxu0 0.0
    %354 = vmatpush1.msra.mxu0 %v327
    %355 = vmatprep.subr.mxu0 0.0
    %356 = vmatpush1.msra.mxu0 %v328
    %357 = vmatprep.subr.mxu0 0.0
    %358 = vmatpush1.msra.mxu0 %v329
    %359 = vmatprep.subr.mxu0 0.0
    %360 = vmatpush1.msra.mxu0 %v330
    %361 = vmatprep.subr.mxu0 0.0
    %362 = vmatpush1.msra.mxu0 %v331
    %363 = vmatprep.subr.mxu0 0.0
    %364 = vmatpush1.msra.mxu0 %v332
    %365 = vmatprep.subr.mxu0 0.0
    %366 = vmatpush1.msra.mxu0 0.0
    %367 = vmatprep.subr.mxu0 0.0
    %368 = vmatpush1.msra.mxu0 0.0
    %369 = vmatprep.subr.mxu0 0.0
    %370 = vmatpush1.msra.mxu0 0.0
    %371 = vmatprep.subr.mxu0 0.0
    %372 = vmatpush1.msra.mxu0 0.0
    %373 = vmatprep.subr.mxu0 0.0
    %374 = vmatpush1.msra.mxu0 0.0
    %375 = vmatprep.subr.mxu0 0.0
    %376 = vmatpush1.msra.mxu0 0.0
    %377 = vmatprep.subr.mxu0 0.0
    %378 = vmatpush1.msra.mxu0 0.0
    %379 = vmatprep.subr.mxu0 0.0
    %380 = vmatpush1.msra.mxu0 0.0
    %381 = vmatprep.subr.mxu0 0.0
    %382 = vmatpush1.msra.mxu0 0.0
    %383 = vmatprep.subr.mxu0 0.0
    %384 = vmatpush1.msra.mxu0 0.0
    %385 = vmatprep.subr.mxu0 0.0
    %386 = vmatpush1.msra.mxu0 0.0
    %387 = vmatprep.subr.mxu0 0.0
    %388 = vmatpush1.msra.mxu0 0.0
    %389 = vmatprep.subr.mxu0 0.0
    %390 = vmatpush1.msra.mxu0 0.0
    %391 = vmatprep.subr.mxu0 0.0
    %392 = vmatpush1.msra.mxu0 0.0
    %393 = vmatprep.subr.mxu0 0.0
    %394 = vmatpush1.msra.mxu0 0.0
    %395 = vmatprep.subr.mxu0 0.0
    %396 = vmatpush1.msra.mxu0 0.0
    %397 = vmatprep.mubr.f32.mxu0 0.0
    %398 = vmatmul.mubr.f32.gmra.mrb[0].mxu0 %v315
    %v399 = vpop.f32.mrb[0].mxu0
    %v400 = vadd.f32 0.0, %v399
    %v401 = vpop.f32.mrb[0].mxu0
    %402 = vmatprep.mubr.f32.mxu0 0.0
    %403 = vmatmul.mubr.f32.gmra.mrb[0].mxu0 %v316
    %v404 = vpop.f32.mrb[0].mxu0
    %v405 = vadd.f32 0.0, %v404
    %v406 = vpop.f32.mrb[0].mxu0
    %407 = vdwg.mxu0
    %v408 = vld [vmem:[%s8] sm:$0x1]
    %v409 = vld [vmem:[%s9] sm:$0x1]
    %v410 = vadd.f32 %v400, %v405
    %v411 = vrot.slane %v410, 4
    %v412 = vadd.f32 %v410, %v411
    %v413 = vrot.slane %v412, 2
    %v414 = vadd.f32 %v412, %v413
    %v415 = vrot.slane %v414, 1
    %v416 = vadd.f32 %v414, %v415
    %v417 = vmul.f32 %v416, 0.0625
    %v418 = vmul.f32 %v400, %v400
    %v419 = vmul.f32 %v405, %v405
    %v420 = vadd.f32 %v418, %v419
    %v421 = vrot.slane %v420, 4
    %v422 = vadd.f32 %v420, %v421
    %v423 = vrot.slane %v422, 2
    %v424 = vadd.f32 %v422, %v423
    %v425 = vrot.slane %v424, 1
    %v426 = vadd.f32 %v424, %v425
    %v427 = vmul.f32 %v426, 0.0625
    %v428 = vmul.f32 %v417, %v417
    %v429 = vsub.f32 %v427, %v428
    %v430 = vmax.f32 %v429, 0.0
    %v431 = vsub.f32 %v400, %v417
    %v432 = vsub.f32 %v405, %v417
    %v433 = vadd.f32 %v430, 1e-05
    %v434 = vrsqrt.pop %v433
    %v435 = vmul.f32 %v431, %v434
    %v436 = vmul.f32 %v432, %v434
    %v438 = vlaneseq
    %v439 = vshrl.u32 %v438, 7
    %v440 = vsub.s32 0, %v439
    %v441 = vrot.slane %v408, %v440
    %v443 = vmul.f32 %v435, %v441
    %v444 = vmul.f32 %v436, %v441
    %v446 = vlaneseq
    %v447 = vshrl.u32 %v446, 7
    %v448 = vsub.s32 0, %v447
    %v449 = vrot.slane %v409, %v448
    %v451 = vadd.f32 %v443, %v449
    %v452 = vadd.f32 %v444, %v449
    %v453 = vld [vmem:[%s10] sm:$0xff]
    %v454 = vld [vmem:[%s10 + $0x8] sm:$0xff]
    %v455 = vld [vmem:[%s10 + $0x10] sm:$0x7]
    %vm456 = vcmask 130048
    %v458 = vsel %vm456, %v453, 0
    %v461 = vsel %vm456, %v454, 0
    %v464 = vsel %vm456, %v455, 0
    %466 = vmatprep.subr.mxu0 0.0
    %467 = vmatpush1.msra.mxu0 %v451
    %468 = vmatprep.subr.mxu0 0.0
    %469 = vmatpush1.msra.mxu0 %v452
    %470 = vmatprep.subr.mxu0 0.0
    %471 = vmatpush1.msra.mxu0 0.0
    %472 = vmatprep.subr.mxu0 0.0
    %473 = vmatpush1.msra.mxu0 0.0
    %474 = vmatprep.subr.mxu0 0.0
    %475 = vmatpush1.msra.mxu0 0.0
    %476 = vmatprep.subr.mxu0 0.0
    %477 = vmatpush1.msra.mxu0 0.0
    %478 = vmatprep.subr.mxu0 0.0
    %479 = vmatpush1.msra.mxu0 0.0
    %480 = vmatprep.subr.mxu0 0.0
    %481 = vmatpush1.msra.mxu0 0.0
    %482 = vmatprep.subr.mxu0 0.0
    %483 = vmatpush1.msra.mxu0 0.0
    %484 = vmatprep.subr.mxu0 0.0
    %485 = vmatpush1.msra.mxu0 0.0
    %486 = vmatprep.subr.mxu0 0.0
    %487 = vmatpush1.msra.mxu0 0.0
    %488 = vmatprep.subr.mxu0 0.0
    %489 = vmatpush1.msra.mxu0 0.0
    %490 = vmatprep.subr.mxu0 0.0
    %491 = vmatpush1.msra.mxu0 0.0
    %492 = vmatprep.subr.mxu0 0.0
    %493 = vmatpush1.msra.mxu0 0.0
    %494 = vmatprep.subr.mxu0 0.0
    %495 = vmatpush1.msra.mxu0 0.0
    %496 = vmatprep.subr.mxu0 0.0
    %497 = vmatpush1.msra.mxu0 0.0
    %498 = vmatprep.subr.mxu0 0.0
    %499 = vmatpush1.msra.mxu0 0.0
    %500 = vmatprep.subr.mxu0 0.0
    %501 = vmatpush1.msra.mxu0 0.0
    %502 = vmatprep.subr.mxu0 0.0
    %503 = vmatpush1.msra.mxu0 0.0
    %504 = vmatprep.subr.mxu0 0.0
    %505 = vmatpush1.msra.mxu0 0.0
    %506 = vmatprep.subr.mxu0 0.0
    %507 = vmatpush1.msra.mxu0 0.0
    %508 = vmatprep.subr.mxu0 0.0
    %509 = vmatpush1.msra.mxu0 0.0
    %510 = vmatprep.subr.mxu0 0.0
    %511 = vmatpush1.msra.mxu0 0.0
    %512 = vmatprep.subr.mxu0 0.0
    %513 = vmatpush1.msra.mxu0 0.0
    %514 = vmatprep.subr.mxu0 0.0
    %515 = vmatpush1.msra.mxu0 0.0
    %516 = vmatprep.subr.mxu0 0.0
    %517 = vmatpush1.msra.mxu0 0.0
    %518 = vmatprep.subr.mxu0 0.0
    %519 = vmatpush1.msra.mxu0 0.0
    %520 = vmatprep.subr.mxu0 0.0
    %521 = vmatpush1.msra.mxu0 0.0
    %522 = vmatprep.subr.mxu0 0.0
    %523 = vmatpush1.msra.mxu0 0.0
    %524 = vmatprep.subr.mxu0 0.0
    %525 = vmatpush1.msra.mxu0 0.0
    %526 = vmatprep.subr.mxu0 0.0
    %527 = vmatpush1.msra.mxu0 0.0
    %528 = vmatprep.subr.mxu0 0.0
    %529 = vmatpush1.msra.mxu0 0.0
    %530 = vmatprep.mubr.f32.mxu0 0.0
    %531 = vmatmul.mubr.f32.gmra.mrb[0].mxu0 %v458
    %v532 = vpop.f32.mrb[0].mxu0
    %v533 = vadd.f32 0.0, %v532
    %v534 = vpop.f32.mrb[0].mxu0
    %535 = vmatprep.mubr.f32.mxu0 0.0
    %536 = vmatmul.mubr.f32.gmra.mrb[0].mxu0 %v461
    %v537 = vpop.f32.mrb[0].mxu0
    %v538 = vadd.f32 0.0, %v537
    %v539 = vpop.f32.mrb[0].mxu0
    %540 = vmatprep.mubr.f32.mxu0 0.0
    %541 = vmatmul.mubr.f32.gmra.mrb[0].mxu0 %v464
    %v542 = vpop.f32.mrb[0].mxu0
    %v543 = vadd.f32 0.0, %v542
    %v544 = vpop.f32.mrb[0].mxu0
    %545 = vdwg.mxu0
    %v546 = vsel %vm456, %v453, 0.0
    %547 = vadd.xlane.f32.xlu0 %v546
    %v548 = vpop.xlane.xlu0 %547
    %v549 = vsel %vm456, %v454, 0.0
    %550 = vadd.xlane.f32.xlu0 %v549
    %v551 = vpop.xlane.xlu0 %550
    %vm552 = vcmask 124928
    %v553 = vsel %vm552, %v455, 0.0
    %554 = vadd.xlane.f32.xlu0 %v553
    %v555 = vpop.xlane.xlu0 %554
    %v556 = vadd.f32 %v548, 0.0005
    %v557 = vadd.f32 %v551, 0.0005
    %v558 = vadd.f32 %v555, 0.0005
    %v559 = vrcp.pop %v556
    %v560 = vmul.f32 %v533, %v559
    %v561 = vrcp.pop %v557
    %v562 = vmul.f32 %v538, %v561
    %v563 = vrcp.pop %v558
    %v564 = vmul.f32 %v543, %v563
    %565 = vst [vmem:[#allocation2] sm:$0xff] %v560
    %566 = vst [vmem:[#allocation2 + $0x8] sm:$0xff] %v562
    %567 = vst [vmem:[#allocation2 + $0x10] sm:$0x7] %v564
    // Predicated region
    $region46: #{_device_forward.3} parent=1 // pred_check
      _
    $region47: #{_device_forward.3} parent=1 // pred_check_branch
      %569 = sbr.rel (0) target = $region49
    $region48: #{_device_forward.3} parent=1 // pred_region
      %s571 = ssub.s32 384, 384
      %572 = vsyncadd [#allocation3], %s571
      %s573 = sshll.u32 [#allocation2], 4
      %s574 = int_to_ptr.vmem [resolvable:$true] %s573
      %579 = dma.vmem_to_hbm [thread:$0]  %s574, 384, %s11, [#allocation3], 128, 128, 8
    $region49: #{_device_forward.3} parent=1 // pred_fallthru
      _
    // Predicated region
    $region50: #{_device_forward.3} parent=1 // pred_check
      _
    $region51: #{_device_forward.3} parent=1 // pred_check_branch
      %581 = sbr.rel (0) target = $region53
    $region52: #{_device_forward.3} parent=1 // pred_region
      %582 = dma.done [#allocation3], 384
    $region53: #{_device_forward.3} parent=1 // pred_fallthru
      _
    %583 = vsyncpa [#allocation3], 1

</llo_original>
